<compile_context>
chip_gen: v7x
topology: tpu7x:2x2x1
jax: 0.10.0
libtpu: 0.0.40
codegen_flags: <defaults>
</compile_context>

<pallas_src>
import math
import functools
import numpy as np

import jax
import jax.numpy as jnp
from jax.experimental import pallas as pl
from jax.experimental.pallas import tpu as pltpu

# ---- small synthetic config (ModelArgs analogue) ----
B, S, D = 2, 8, 32          # batch, seq, model dim
H = 4                       # n_heads
HD = D // H                 # head_dim
MULTIPLE_OF = 16
EPS = 1e-5
THETA = 10000.0

LANE = 128                  # TPU lane width
DP = LANE                   # model dim padded to one full lane tile


def _ffn_hidden(dim, multiple_of):
    hidden = 4 * dim
    hidden = int(2 * hidden / 3)
    return multiple_of * ((hidden + multiple_of - 1) // multiple_of)


FFN = _ffn_hidden(D, MULTIPLE_OF)               # 96
FFNP = ((FFN + LANE - 1) // LANE) * LANE        # 128 (lane-padded hidden dim)


# ----------------------------- Pallas kernel -----------------------------
def encoder_block_kernel(x_ref, aw_ref, wq_ref, wk_ref, wv_ref, wo_ref,
                         cos_ref, su_ref, sd_ref, hm_ref, fw_ref,
                         w1_ref, w2_ref, w3_ref, o_ref,
                         *, n_heads, head_dim, d_model, eps):
    b_sz, s_len, dp = x_ref.shape
    rows = b_sz * s_len

    x2 = x_ref[...].reshape(rows, dp)                  # (B*S, DP) f32, pad lanes = 0

    def rmsnorm(t, w_row):
        # padded lanes are exactly zero; divide by the true model dim.
        ms = jnp.sum(t * t, axis=-1, keepdims=True) * (1.0 / d_model)
        return t * jax.lax.rsqrt(ms + eps) * w_row

    # --- attention norm + QKV projections (full 128-lane MXU matmuls) ---
    xn = rmsnorm(x2, aw_ref[...])
    q = jnp.dot(xn, wq_ref[...], preferred_element_type=jnp.float32)
    k = jnp.dot(xn, wk_ref[...], preferred_element_type=jnp.float32)
    v = jnp.dot(xn, wv_ref[...], preferred_element_type=jnp.float32)

    # --- RoPE via lane rolls (XLU).  Parity sign, pair selection and lane
    #     padding are all baked into the cos / s_up / s_dn tables.
    #     pltpu.roll uses the numpy convention: roll(x, s)[l] == x[l - s],
    #     so roll(t, dp-1)[l] == t[l+1] ("up") and roll(t, 1)[l] == t[l-1]. ---
    cos = cos_ref[...][None]                           # (1, S, DP)
    su = su_ref[...][None]
    sd = sd_ref[...][None]

    def rope(t):
        t3 = t.reshape(b_sz, s_len, dp)
        up = pltpu.roll(t3, dp - 1, axis=2)            # lane l <- lane l+1
        dn = pltpu.roll(t3, 1, axis=2)                 # lane l <- lane l-1
        return t3 * cos + up * su + dn * sd

    q3 = rope(q)                                       # (B, S, DP)
    k3 = rope(k)
    v3 = v.reshape(b_sz, s_len, dp)

    # --- per-head views via lane masks (registers only, no VMEM scratch).
    #     hm[h] is 1.0 on the HD lanes of head h and 0.0 elsewhere, so the
    #     contraction over the full 128 lanes reduces to the per-head dot. ---
    hm = hm_ref[...][None]                             # (1, H, S, DP)
    qh = (q3[:, None] * hm).reshape(b_sz * n_heads, s_len, dp)
    kh = (k3[:, None] * hm).reshape(b_sz * n_heads, s_len, dp)
    vh = (v3[:, None] * hm).reshape(b_sz * n_heads, s_len, dp)

    # --- attention: batched contraction over all (batch, head) pairs ---
    scale = 1.0 / math.sqrt(head_dim)
    scores = jnp.einsum("nqd,nkd->nqk", qh, kh,
                        preferred_element_type=jnp.float32) * scale
    scores = scores - jnp.max(scores, axis=-1, keepdims=True)
    p = jnp.exp(scores)
    p = p * pl.reciprocal(jnp.sum(p, axis=-1, keepdims=True), approx=True)
    ao = jnp.einsum("nqk,nkd->nqd", p, vh,
                    preferred_element_type=jnp.float32)   # (B*H, S, DP)

    # --- head recombination: each head's output lives in disjoint lanes, so
    #     a sum over heads yields the lane-dense (B*S, DP) attention slab ---
    attn = jnp.sum(ao.reshape(b_sz, n_heads, s_len, dp), axis=1)
    attn = attn.reshape(rows, dp)

    # --- first residual; wo is (DP, DP) so this is a full-lane MXU matmul ---
    h1 = x2 + jnp.dot(attn, wo_ref[...], preferred_element_type=jnp.float32)

    # --- ffn norm + SwiGLU feed-forward + second residual ---
    hn = rmsnorm(h1, fw_ref[...])
    g = jnp.dot(hn, w1_ref[...], preferred_element_type=jnp.float32)
    u = jnp.dot(hn, w3_ref[...], preferred_element_type=jnp.float32)
    ff = jnp.dot(g * jax.nn.sigmoid(g) * u, w2_ref[...],
                 preferred_element_type=jnp.float32)

    o_ref[...] = (h1 + ff).reshape(b_sz, s_len, dp).astype(o_ref.dtype)


# ----------------------------- wrapper -----------------------------
def _pad_last(a, target):
    pad = target - a.shape[-1]
    if pad == 0:
        return a
    widths = [(0, 0)] * (a.ndim - 1) + [(0, pad)]
    return jnp.pad(a, widths)


def _pad2(a, rows, cols):
    return jnp.pad(a, ((0, rows - a.shape[0]), (0, cols - a.shape[1])))


def encoder_block(x, params, freqs_complex, start_pos=0):
    assert start_pos == 0, "KV-cache / start_pos > 0 path not implemented"
    b, s, d = x.shape
    # Roll-based interleaved RoPE requires even head_dim and head offsets that
    # never split an (even, odd) lane pair across a head boundary.
    assert d % H == 0 and HD % 2 == 0 and d <= DP

    # ---- lane-pad activations and weights (zeros in the padded lanes) ----
    x_p = _pad_last(x.astype(jnp.float32), DP)                  # (B, S, DP)
    aw = _pad_last(params["attn_norm_w"][None, :], DP)          # (1, DP)
    fw = _pad_last(params["ffn_norm_w"][None, :], DP)
    wq = _pad2(params["wq"], DP, DP)
    wk = _pad2(params["wk"], DP, DP)
    wv = _pad2(params["wv"], DP, DP)
    wo = _pad2(params["wo"], DP, DP)
    w1 = _pad2(params["w1"], DP, FFNP)
    w3 = _pad2(params["w3"], DP, FFNP)
    w2 = _pad2(params["w2"], FFNP, DP)

    # ---- RoPE tables: interleaved (complex) convention; parity sign baked in.
    #      pltpu.roll follows numpy/jnp.roll semantics, so roll(t, DP-1) gives
    #      the lane-(l+1) neighbour and roll(t, 1) the lane-(l-1) neighbour. ----
    cos_half = jnp.real(freqs_complex).astype(jnp.float32)      # (S, HD/2)
    sin_half = jnp.imag(freqs_complex).astype(jnp.float32)
    cos_rep = jnp.tile(jnp.repeat(cos_half, 2, axis=1), (1, H))  # (S, D)
    sin_rep = jnp.tile(jnp.repeat(sin_half, 2, axis=1), (1, H))
    even = (jnp.arange(d) % 2 == 0)[None, :]
    s_up = jnp.where(even, -sin_rep, 0.0)    # even lane pairs with neighbor l+1
    s_dn = jnp.where(even, 0.0, sin_rep)     # odd  lane pairs with neighbor l-1
    cosF = _pad_last(cos_rep, DP)
    s_up = _pad_last(s_up, DP)
    s_dn = _pad_last(s_dn, DP)

    # ---- per-head lane-selection mask: (H, S, DP), 1.0 on head h's lanes ----
    lane = jnp.arange(DP)
    hmask2 = ((lane[None, :] // HD) == jnp.arange(H)[:, None]) & (lane[None, :] < d)
    hmask = jnp.broadcast_to(hmask2.astype(jnp.float32)[:, None, :], (H, s, DP))

    kernel = functools.partial(encoder_block_kernel,
                               n_heads=H, head_dim=HD, d_model=d, eps=EPS)

    out_p = pl.pallas_call(
        kernel,
        out_shape=jax.ShapeDtypeStruct((b, s, DP), jnp.float32),
        compiler_params=pltpu.CompilerParams(
            vmem_limit_bytes=32 * 1024 * 1024),
    )(x_p, aw, wq, wk, wv, wo, cosF, s_up, s_dn, hmask, fw, w1, w2, w3)

    return out_p[..., :d]


# ----------------------------- params / inputs -----------------------------
def init_params(key):
    ks = jax.random.split(key, 7)

    def lin(k, fan_in, fan_out):
        return jax.random.normal(k, (fan_in, fan_out), jnp.float32) / math.sqrt(fan_in)

    return dict(
        attn_norm_w=jnp.ones((D,), jnp.float32),   # RMSNorm init = ones
        ffn_norm_w=jnp.ones((D,), jnp.float32),
        wq=lin(ks[0], D, D), wk=lin(ks[1], D, D),
        wv=lin(ks[2], D, D), wo=lin(ks[3], D, D),
        w1=lin(ks[4], D, FFN), w2=lin(ks[5], FFN, D), w3=lin(ks[6], D, FFN),
    )


def make_freqs(seq_len, head_dim, theta=10000.0):
    inv = 1.0 / (theta ** (np.arange(0, head_dim, 2)[: head_dim // 2] / head_dim))
    angles = np.outer(np.arange(seq_len), inv)               # (S, HD/2)
    return jnp.asarray(np.exp(1j * angles).astype(np.complex64))


# ----------------------------- pure-JAX reference -----------------------------
def ref_encoder_block(x, params, freqs_complex):
    def rms(t, w):
        return t * jax.lax.rsqrt(jnp.mean(t * t, axis=-1, keepdims=True) + EPS) * w

    xn = rms(x, params["attn_norm_w"])
    q = xn @ params["wq"]
    k = xn @ params["wk"]
    v = xn @ params["wv"]

    def rope(t):
        tc = t.reshape(B, S, H, HD // 2, 2)
        tc = jax.lax.complex(tc[..., 0], tc[..., 1]) * freqs_complex[None, :, None, :]
        return jnp.stack([jnp.real(tc), jnp.imag(tc)], axis=-1).reshape(B, S, D)

    q, k = rope(q), rope(k)
    qh = q.reshape(B, S, H, HD)
    kh = k.reshape(B, S, H, HD)
    vh = v.reshape(B, S, H, HD)
    sc = jnp.einsum("bqhd,bkhd->bhqk", qh, kh) / math.sqrt(HD)
    p = jax.nn.softmax(sc, axis=-1)
    attn = jnp.einsum("bhqk,bkhd->bqhd", p, vh).reshape(B, S, D)
    h1 = x + attn @ params["wo"]
    hn = rms(h1, params["ffn_norm_w"])
    return h1 + (jax.nn.silu(hn @ params["w1"]) * (hn @ params["w3"])) @ params["w2"]


# ----------------------------- main -----------------------------
if __name__ == "__main__":
    key = jax.random.PRNGKey(0)
    kx, kp = jax.random.split(key)
    x = jax.random.normal(kx, (B, S, D), jnp.float32)
    params = init_params(kp)
    freqs = make_freqs(S, HD, THETA)

    out = encoder_block(x, params, freqs, start_pos=0)
    out = jax.block_until_ready(out)

    ref = ref_encoder_block(x, params, freqs)
    assert out.shape == (B, S, D)
    np.testing.assert_allclose(np.asarray(out), np.asarray(ref),
                               rtol=5e-3, atol=5e-3)
    print("KERNEL_OK")
</pallas_src>

<mosaic_0001>
module attributes {stable_mosaic.version = 11 : i64} {
  func.func @encoder_block_kernel(%arg0: memref<2x8x128xf32, #tpu.memory_space<vmem>>, %arg1: memref<1x128xf32, #tpu.memory_space<vmem>>, %arg2: memref<128x128xf32, #tpu.memory_space<vmem>>, %arg3: memref<128x128xf32, #tpu.memory_space<vmem>>, %arg4: memref<128x128xf32, #tpu.memory_space<vmem>>, %arg5: memref<128x128xf32, #tpu.memory_space<vmem>>, %arg6: memref<8x128xf32, #tpu.memory_space<vmem>>, %arg7: memref<8x128xf32, #tpu.memory_space<vmem>>, %arg8: memref<8x128xf32, #tpu.memory_space<vmem>>, %arg9: memref<4x8x128xf32, #tpu.memory_space<vmem>>, %arg10: memref<1x128xf32, #tpu.memory_space<vmem>>, %arg11: memref<128x128xf32, #tpu.memory_space<vmem>>, %arg12: memref<128x128xf32, #tpu.memory_space<vmem>>, %arg13: memref<128x128xf32, #tpu.memory_space<vmem>>, %arg14: memref<2x8x128xf32, #tpu.memory_space<vmem>>) attributes {dimension_semantics = [], scalar_prefetch = 0 : i64, scratch_operands = 0 : i64, tpu.core_type = #tpu.core_type<tc>} {
    %c0 = arith.constant 0 : index
    %c0_0 = arith.constant 0 : index
    %c0_1 = arith.constant 0 : index
    %0 = vector.load %arg0[%c0, %c0_0, %c0_1] : memref<2x8x128xf32, #tpu.memory_space<vmem>>, vector<2x8x128xf32>
    %1 = vector.shape_cast %0 : vector<2x8x128xf32> to vector<16x128xf32>
    %c0_2 = arith.constant 0 : index
    %c0_3 = arith.constant 0 : index
    %2 = vector.load %arg1[%c0_2, %c0_3] : memref<1x128xf32, #tpu.memory_space<vmem>>, vector<1x128xf32>
    %3 = arith.mulf %1, %1 : vector<16x128xf32>
    %cst = arith.constant dense<0.000000e+00> : vector<16xf32>
    %4 = vector.multi_reduction <add>, %3, %cst [1] : vector<16x128xf32> to vector<16xf32>
    %5 = vector.shape_cast %4 : vector<16xf32> to vector<16x1xf32>
    %cst_4 = arith.constant 3.125000e-02 : f32
    %6 = vector.broadcast %cst_4 : f32 to vector<16x1xf32>
    %7 = arith.mulf %5, %6 : vector<16x1xf32>
    %cst_5 = arith.constant 9.99999974E-6 : f32
    %8 = vector.broadcast %cst_5 : f32 to vector<16x1xf32>
    %9 = arith.addf %7, %8 : vector<16x1xf32>
    %10 = math.rsqrt %9 : vector<16x1xf32>
    %11 = vector.broadcast %10 : vector<16x1xf32> to vector<16x128xf32>
    %12 = arith.mulf %1, %11 : vector<16x128xf32>
    %13 = vector.broadcast %2 : vector<1x128xf32> to vector<16x128xf32>
    %14 = arith.mulf %12, %13 : vector<16x128xf32>
    %c0_6 = arith.constant 0 : index
    %c0_7 = arith.constant 0 : index
    %15 = vector.load %arg2[%c0_6, %c0_7] : memref<128x128xf32, #tpu.memory_space<vmem>>, vector<128x128xf32>
    %cst_8 = arith.constant dense<0.000000e+00> : vector<16x128xf32>
    %16 = tpu.matmul %14, %15, %cst_8 {dimension_numbers = #tpu.dot_dimension_numbers<[1], [0], [0], [1], [0, 0, 1, 1], [], []>} : vector<16x128xf32>, vector<128x128xf32>, vector<16x128xf32> -> vector<16x128xf32>
    %c0_9 = arith.constant 0 : index
    %c0_10 = arith.constant 0 : index
    %17 = vector.load %arg3[%c0_9, %c0_10] : memref<128x128xf32, #tpu.memory_space<vmem>>, vector<128x128xf32>
    %cst_11 = arith.constant dense<0.000000e+00> : vector<16x128xf32>
    %18 = tpu.matmul %14, %17, %cst_11 {dimension_numbers = #tpu.dot_dimension_numbers<[1], [0], [0], [1], [0, 0, 1, 1], [], []>} : vector<16x128xf32>, vector<128x128xf32>, vector<16x128xf32> -> vector<16x128xf32>
    %c0_12 = arith.constant 0 : index
    %c0_13 = arith.constant 0 : index
    %19 = vector.load %arg4[%c0_12, %c0_13] : memref<128x128xf32, #tpu.memory_space<vmem>>, vector<128x128xf32>
    %cst_14 = arith.constant dense<0.000000e+00> : vector<16x128xf32>
    %20 = tpu.matmul %14, %19, %cst_14 {dimension_numbers = #tpu.dot_dimension_numbers<[1], [0], [0], [1], [0, 0, 1, 1], [], []>} : vector<16x128xf32>, vector<128x128xf32>, vector<16x128xf32> -> vector<16x128xf32>
    %c0_15 = arith.constant 0 : index
    %c0_16 = arith.constant 0 : index
    %21 = vector.load %arg6[%c0_15, %c0_16] : memref<8x128xf32, #tpu.memory_space<vmem>>, vector<8x128xf32>
    %22 = vector.shape_cast %21 : vector<8x128xf32> to vector<1x8x128xf32>
    %c0_17 = arith.constant 0 : index
    %c0_18 = arith.constant 0 : index
    %23 = vector.load %arg7[%c0_17, %c0_18] : memref<8x128xf32, #tpu.memory_space<vmem>>, vector<8x128xf32>
    %24 = vector.shape_cast %23 : vector<8x128xf32> to vector<1x8x128xf32>
    %c0_19 = arith.constant 0 : index
    %c0_20 = arith.constant 0 : index
    %25 = vector.load %arg8[%c0_19, %c0_20] : memref<8x128xf32, #tpu.memory_space<vmem>>, vector<8x128xf32>
    %26 = vector.shape_cast %25 : vector<8x128xf32> to vector<1x8x128xf32>
    %27 = vector.shape_cast %16 : vector<16x128xf32> to vector<2x8x128xf32>
    %c127_i32 = arith.constant 127 : i32
    %28 = tpu.dynamic_rotate %27 by %c127_i32 dim 2 : vector<2x8x128xf32>, i32 -> vector<2x8x128xf32>
    %c1_i32 = arith.constant 1 : i32
    %29 = tpu.dynamic_rotate %27 by %c1_i32 dim 2 : vector<2x8x128xf32>, i32 -> vector<2x8x128xf32>
    %30 = vector.broadcast %22 : vector<1x8x128xf32> to vector<2x8x128xf32>
    %31 = arith.mulf %27, %30 : vector<2x8x128xf32>
    %32 = vector.broadcast %24 : vector<1x8x128xf32> to vector<2x8x128xf32>
    %33 = arith.mulf %28, %32 : vector<2x8x128xf32>
    %34 = arith.addf %31, %33 : vector<2x8x128xf32>
    %35 = vector.broadcast %26 : vector<1x8x128xf32> to vector<2x8x128xf32>
    %36 = arith.mulf %29, %35 : vector<2x8x128xf32>
    %37 = arith.addf %34, %36 : vector<2x8x128xf32>
    %38 = vector.shape_cast %18 : vector<16x128xf32> to vector<2x8x128xf32>
    %c127_i32_21 = arith.constant 127 : i32
    %39 = tpu.dynamic_rotate %38 by %c127_i32_21 dim 2 : vector<2x8x128xf32>, i32 -> vector<2x8x128xf32>
    %c1_i32_22 = arith.constant 1 : i32
    %40 = tpu.dynamic_rotate %38 by %c1_i32_22 dim 2 : vector<2x8x128xf32>, i32 -> vector<2x8x128xf32>
    %41 = vector.broadcast %22 : vector<1x8x128xf32> to vector<2x8x128xf32>
    %42 = arith.mulf %38, %41 : vector<2x8x128xf32>
    %43 = vector.broadcast %24 : vector<1x8x128xf32> to vector<2x8x128xf32>
    %44 = arith.mulf %39, %43 : vector<2x8x128xf32>
    %45 = arith.addf %42, %44 : vector<2x8x128xf32>
    %46 = vector.broadcast %26 : vector<1x8x128xf32> to vector<2x8x128xf32>
    %47 = arith.mulf %40, %46 : vector<2x8x128xf32>
    %48 = arith.addf %45, %47 : vector<2x8x128xf32>
    %49 = vector.shape_cast %20 : vector<16x128xf32> to vector<2x8x128xf32>
    %c0_23 = arith.constant 0 : index
    %c0_24 = arith.constant 0 : index
    %c0_25 = arith.constant 0 : index
    %50 = vector.load %arg9[%c0_23, %c0_24, %c0_25] : memref<4x8x128xf32, #tpu.memory_space<vmem>>, vector<4x8x128xf32>
    %51 = vector.shape_cast %50 : vector<4x8x128xf32> to vector<1x4x8x128xf32>
    %52 = vector.shape_cast %37 : vector<2x8x128xf32> to vector<2x1x8x128xf32>
    %53 = vector.broadcast %52 : vector<2x1x8x128xf32> to vector<2x4x8x128xf32>
    %54 = vector.broadcast %51 : vector<1x4x8x128xf32> to vector<2x4x8x128xf32>
    %55 = arith.mulf %53, %54 : vector<2x4x8x128xf32>
    %56 = vector.shape_cast %55 : vector<2x4x8x128xf32> to vector<8x8x128xf32>
    %57 = vector.shape_cast %48 : vector<2x8x128xf32> to vector<2x1x8x128xf32>
    %58 = vector.broadcast %57 : vector<2x1x8x128xf32> to vector<2x4x8x128xf32>
    %59 = vector.broadcast %51 : vector<1x4x8x128xf32> to vector<2x4x8x128xf32>
    %60 = arith.mulf %58, %59 : vector<2x4x8x128xf32>
    %61 = vector.shape_cast %60 : vector<2x4x8x128xf32> to vector<8x8x128xf32>
    %62 = vector.shape_cast %49 : vector<2x8x128xf32> to vector<2x1x8x128xf32>
    %63 = vector.broadcast %62 : vector<2x1x8x128xf32> to vector<2x4x8x128xf32>
    %64 = vector.broadcast %51 : vector<1x4x8x128xf32> to vector<2x4x8x128xf32>
    %65 = arith.mulf %63, %64 : vector<2x4x8x128xf32>
    %66 = vector.shape_cast %65 : vector<2x4x8x128xf32> to vector<8x8x128xf32>
    "tpu.trace_start"() <{level = 10 : i32, message = "nqd,nkd->nqk"}> : () -> ()
    %cst_26 = arith.constant dense<0.000000e+00> : vector<8x8x8xf32>
    %67 = tpu.matmul %56, %61, %cst_26 {dimension_numbers = #tpu.dot_dimension_numbers<[2], [2], [1], [1], [0, 0, 0, 1, 1, 1], [0], [0]>} : vector<8x8x128xf32>, vector<8x8x128xf32>, vector<8x8x8xf32> -> vector<8x8x8xf32>
    "tpu.trace_stop"() : () -> ()
    %cst_27 = arith.constant 0.353553385 : f32
    %68 = vector.broadcast %cst_27 : f32 to vector<8x8x8xf32>
    %69 = arith.mulf %67, %68 : vector<8x8x8xf32>
    %cst_28 = arith.constant dense<0xFF800000> : vector<8x8xf32>
    %70 = vector.multi_reduction <maximumf>, %69, %cst_28 [2] : vector<8x8x8xf32> to vector<8x8xf32>
    %71 = vector.shape_cast %70 : vector<8x8xf32> to vector<8x8x1xf32>
    %72 = vector.broadcast %71 : vector<8x8x1xf32> to vector<8x8x8xf32>
    %73 = arith.subf %69, %72 : vector<8x8x8xf32>
    %74 = math.exp %73 : vector<8x8x8xf32>
    %cst_29 = arith.constant dense<0.000000e+00> : vector<8x8xf32>
    %75 = vector.multi_reduction <add>, %74, %cst_29 [2] : vector<8x8x8xf32> to vector<8x8xf32>
    %76 = vector.shape_cast %75 : vector<8x8xf32> to vector<8x8x1xf32>
    %77 = tpu.reciprocal %76 {approx = true} : vector<8x8x1xf32> -> vector<8x8x1xf32>
    %78 = vector.broadcast %77 : vector<8x8x1xf32> to vector<8x8x8xf32>
    %79 = arith.mulf %74, %78 : vector<8x8x8xf32>
    "tpu.trace_start"() <{level = 10 : i32, message = "nqk,nkd->nqd"}> : () -> ()
    %cst_30 = arith.constant dense<0.000000e+00> : vector<8x8x128xf32>
    %80 = tpu.matmul %79, %66, %cst_30 {dimension_numbers = #tpu.dot_dimension_numbers<[2], [1], [1], [2], [0, 0, 0, 1, 1, 2], [0], [0]>} : vector<8x8x8xf32>, vector<8x8x128xf32>, vector<8x8x128xf32> -> vector<8x8x128xf32>
    "tpu.trace_stop"() : () -> ()
    %81 = vector.shape_cast %80 : vector<8x8x128xf32> to vector<2x4x8x128xf32>
    %cst_31 = arith.constant dense<0.000000e+00> : vector<2x8x128xf32>
    %82 = vector.multi_reduction <add>, %81, %cst_31 [1] : vector<2x4x8x128xf32> to vector<2x8x128xf32>
    %83 = vector.shape_cast %82 : vector<2x8x128xf32> to vector<16x128xf32>
    %c0_32 = arith.constant 0 : index
    %c0_33 = arith.constant 0 : index
    %84 = vector.load %arg5[%c0_32, %c0_33] : memref<128x128xf32, #tpu.memory_space<vmem>>, vector<128x128xf32>
    %cst_34 = arith.constant dense<0.000000e+00> : vector<16x128xf32>
    %85 = tpu.matmul %83, %84, %cst_34 {dimension_numbers = #tpu.dot_dimension_numbers<[1], [0], [0], [1], [0, 0, 1, 1], [], []>} : vector<16x128xf32>, vector<128x128xf32>, vector<16x128xf32> -> vector<16x128xf32>
    %86 = arith.addf %1, %85 : vector<16x128xf32>
    %c0_35 = arith.constant 0 : index
    %c0_36 = arith.constant 0 : index
    %87 = vector.load %arg10[%c0_35, %c0_36] : memref<1x128xf32, #tpu.memory_space<vmem>>, vector<1x128xf32>
    %88 = arith.mulf %86, %86 : vector<16x128xf32>
    %cst_37 = arith.constant dense<0.000000e+00> : vector<16xf32>
    %89 = vector.multi_reduction <add>, %88, %cst_37 [1] : vector<16x128xf32> to vector<16xf32>
    %90 = vector.shape_cast %89 : vector<16xf32> to vector<16x1xf32>
    %cst_38 = arith.constant 3.125000e-02 : f32
    %91 = vector.broadcast %cst_38 : f32 to vector<16x1xf32>
    %92 = arith.mulf %90, %91 : vector<16x1xf32>
    %cst_39 = arith.constant 9.99999974E-6 : f32
    %93 = vector.broadcast %cst_39 : f32 to vector<16x1xf32>
    %94 = arith.addf %92, %93 : vector<16x1xf32>
    %95 = math.rsqrt %94 : vector<16x1xf32>
    %96 = vector.broadcast %95 : vector<16x1xf32> to vector<16x128xf32>
    %97 = arith.mulf %86, %96 : vector<16x128xf32>
    %98 = vector.broadcast %87 : vector<1x128xf32> to vector<16x128xf32>
    %99 = arith.mulf %97, %98 : vector<16x128xf32>
    %c0_40 = arith.constant 0 : index
    %c0_41 = arith.constant 0 : index
    %100 = vector.load %arg11[%c0_40, %c0_41] : memref<128x128xf32, #tpu.memory_space<vmem>>, vector<128x128xf32>
    %cst_42 = arith.constant dense<0.000000e+00> : vector<16x128xf32>
    %101 = tpu.matmul %99, %100, %cst_42 {dimension_numbers = #tpu.dot_dimension_numbers<[1], [0], [0], [1], [0, 0, 1, 1], [], []>} : vector<16x128xf32>, vector<128x128xf32>, vector<16x128xf32> -> vector<16x128xf32>
    %c0_43 = arith.constant 0 : index
    %c0_44 = arith.constant 0 : index
    %102 = vector.load %arg13[%c0_43, %c0_44] : memref<128x128xf32, #tpu.memory_space<vmem>>, vector<128x128xf32>
    %cst_45 = arith.constant dense<0.000000e+00> : vector<16x128xf32>
    %103 = tpu.matmul %99, %102, %cst_45 {dimension_numbers = #tpu.dot_dimension_numbers<[1], [0], [0], [1], [0, 0, 1, 1], [], []>} : vector<16x128xf32>, vector<128x128xf32>, vector<16x128xf32> -> vector<16x128xf32>
    %104 = arith.negf %101 : vector<16x128xf32>
    %105 = math.exp %104 : vector<16x128xf32>
    %cst_46 = arith.constant 1.000000e+00 : f32
    %106 = vector.broadcast %cst_46 : f32 to vector<16x128xf32>
    %107 = arith.addf %106, %105 : vector<16x128xf32>
    %108 = arith.divf %106, %107 : vector<16x128xf32>
    %109 = arith.mulf %101, %108 : vector<16x128xf32>
    %110 = arith.mulf %109, %103 : vector<16x128xf32>
    %c0_47 = arith.constant 0 : index
    %c0_48 = arith.constant 0 : index
    %111 = vector.load %arg12[%c0_47, %c0_48] : memref<128x128xf32, #tpu.memory_space<vmem>>, vector<128x128xf32>
    %cst_49 = arith.constant dense<0.000000e+00> : vector<16x128xf32>
    %112 = tpu.matmul %110, %111, %cst_49 {dimension_numbers = #tpu.dot_dimension_numbers<[1], [0], [0], [1], [0, 0, 1, 1], [], []>} : vector<16x128xf32>, vector<128x128xf32>, vector<16x128xf32> -> vector<16x128xf32>
    %113 = arith.addf %86, %112 : vector<16x128xf32>
    %114 = vector.shape_cast %113 : vector<16x128xf32> to vector<2x8x128xf32>
    %c0_50 = arith.constant 0 : index
    %c0_51 = arith.constant 0 : index
    %c0_52 = arith.constant 0 : index
    %115 = vector.load %arg14[%c0_50, %c0_51, %c0_52] : memref<2x8x128xf32, #tpu.memory_space<vmem>>, vector<2x8x128xf32>
    tpu.vector_store %arg14[%c0_50, %c0_51, %c0_52], %114 {strides = array<i32>} : memref<2x8x128xf32, #tpu.memory_space<vmem>>, vector<2x8x128xf32>,
    return
  }
}

</mosaic_0001>

<llo_original>
// kernel: tpu_custom_call.1
$region0: #{tpu_custom_call.1}
  #allocation0 [shape = 'u32[]', space=smem, size = 0x4, offset = 0x4, fixed_abs, tag = 'smem constant byte address 0x4 - core index']
  #allocation1 [shape = 'u32[144,128]{1,0:T(1,128)}', space=vmem, size = 0x12000, scoped, tag = 'internal scratch']
  %s0 = inlined_call_operand.hbm [shape: f32[2,8,128], index: 0, kind: input, shape index: {}]
  %s1 = inlined_call_operand.vmem [shape: f32[1,128], index: 1, kind: input, shape index: {}]
  %s2 = inlined_call_operand.hbm [shape: f32[128,128], index: 2, kind: input, shape index: {}]
  %s3 = inlined_call_operand.hbm [shape: f32[128,128], index: 3, kind: input, shape index: {}]
  %s4 = inlined_call_operand.hbm [shape: f32[128,128], index: 4, kind: input, shape index: {}]
  %s5 = inlined_call_operand.hbm [shape: f32[128,128], index: 5, kind: input, shape index: {}]
  %s6 = inlined_call_operand.hbm [shape: f32[8,128], index: 6, kind: input, shape index: {}]
  %s7 = inlined_call_operand.hbm [shape: f32[8,128], index: 7, kind: input, shape index: {}]
  %s8 = inlined_call_operand.hbm [shape: f32[8,128], index: 8, kind: input, shape index: {}]
  %s9 = inlined_call_operand.vmem [shape: f32[4,8,128], index: 9, kind: input, shape index: {}]
  %s10 = inlined_call_operand.vmem [shape: f32[1,128], index: 10, kind: input, shape index: {}]
  %s11 = inlined_call_operand.hbm [shape: f32[128,128], index: 11, kind: input, shape index: {}]
  %s12 = inlined_call_operand.hbm [shape: f32[128,128], index: 12, kind: input, shape index: {}]
  %s13 = inlined_call_operand.hbm [shape: f32[128,128], index: 13, kind: input, shape index: {}]
  %s14 = inlined_call_operand.hbm [shape: f32[2,8,128], index: 14, kind: output, shape index: {}]
  %s15 = sld [smem:[#allocation0]]
  $region110: #{tpu_custom_call.1} parent=0
    _
  %s17 = ssub.s32 1, %s15
  %s18 = scalar_select 0, %s17, %s15
  $region1: #{tpu_custom_call.1} parent=0
    #allocation2 [shape = 'u8[8192]{0}', space=vmem, size = 0x2000, scoped, tag = 'input window, operand 0, single buffered']
    #allocation3 [shape = 's32[1]{0}', space=sflag, size = 0x4, scoped, tag = 'scoped memory for tpu_custom_call.1']
    #allocation4 [shape = 's32[1]{0}', space=sflag, size = 0x4, scoped, tag = 'scoped memory for tpu_custom_call.1']
    #allocation5 [shape = 'u8[65536]{0}', space=vmem, size = 0x10000, scoped, tag = 'input window, operand 2, single buffered']
    #allocation6 [shape = 's32[1]{0}', space=sflag, size = 0x4, scoped, tag = 'scoped memory for tpu_custom_call.1']
    #allocation7 [shape = 'u8[65536]{0}', space=vmem, size = 0x10000, scoped, tag = 'input window, operand 3, single buffered']
    #allocation8 [shape = 'u8[65536]{0}', space=vmem, size = 0x10000, scoped, tag = 'input window, operand 4, single buffered']
    #allocation9 [shape = 's32[1]{0}', space=sflag, size = 0x4, scoped, tag = 'scoped memory for tpu_custom_call.1']
    #allocation10 [shape = 'u8[65536]{0}', space=vmem, size = 0x10000, scoped, tag = 'input window, operand 5, single buffered']
    #allocation11 [shape = 'u8[4096]{0}', space=vmem, size = 0x1000, scoped, tag = 'input window, operand 6, single buffered']
    #allocation12 [shape = 's32[1]{0}', space=sflag, size = 0x4, scoped, tag = 'scoped memory for tpu_custom_call.1']
    #allocation13 [shape = 'u8[4096]{0}', space=vmem, size = 0x1000, scoped, tag = 'input window, operand 7, single buffered']
    #allocation14 [shape = 'u8[4096]{0}', space=vmem, size = 0x1000, scoped, tag = 'input window, operand 8, single buffered']
    #allocation15 [shape = 's32[1]{0}', space=sflag, size = 0x4, scoped, tag = 'scoped memory for tpu_custom_call.1']
    #allocation16 [shape = 'u8[65536]{0}', space=vmem, size = 0x10000, scoped, tag = 'input window, operand 11, single buffered']
    #allocation17 [shape = 'u8[65536]{0}', space=vmem, size = 0x10000, scoped, tag = 'input window, operand 12, single buffered']
    #allocation18 [shape = 's32[1]{0}', space=sflag, size = 0x4, scoped, tag = 'scoped memory for tpu_custom_call.1']
    #allocation19 [shape = 'u8[65536]{0}', space=vmem, size = 0x10000, scoped, tag = 'input window, operand 13, single buffered']
    #allocation20 [shape = 'u8[8192]{0}', space=vmem, size = 0x2000, scoped, tag = 'output window, operand 0, single buffered']
    %19 = vsyncpa [#allocation3], 0
    %20 = vsyncpa [#allocation6], 0
    %21 = vsyncpa [#allocation9], 0
    %22 = vsyncpa [#allocation12], 0
    %23 = vsyncpa [#allocation15], 0
    %24 = vsyncpa [#allocation18], 0
    %25 = vsyncpa [#allocation4], 0
    // Predicated region
    $region2: #{tpu_custom_call.1} parent=1 // pred_check
      _
    $region3: #{tpu_custom_call.1} parent=1 // pred_check_branch
      %27 = sbr.rel (0) target = $region5
    $region4: #{tpu_custom_call.1} parent=1 // pred_region
      %s29 = ssub.s32 256, 256
      %30 = vsyncadd [#allocation3], %s29
      %s31 = sshll.u32 [#allocation2], 4
      %s32 = int_to_ptr.vmem [resolvable:$true] %s31
      %37 = dma.hbm_to_vmem [thread:$0]  %s0, 256, %s32, [#allocation3], 128, 128, 8
    $region5: #{tpu_custom_call.1} parent=1 // pred_fallthru
      _
    // Predicated region
    $region6: #{tpu_custom_call.1} parent=1 // pred_check
      _
    $region7: #{tpu_custom_call.1} parent=1 // pred_check_branch
      %39 = sbr.rel (0) target = $region9
    $region8: #{tpu_custom_call.1} parent=1 // pred_region
      _
    $region9: #{tpu_custom_call.1} parent=1 // pred_fallthru
      _
    // Predicated region
    $region10: #{tpu_custom_call.1} parent=1 // pred_check
      _
    $region11: #{tpu_custom_call.1} parent=1 // pred_check_branch
      %41 = sbr.rel (0) target = $region13
    $region12: #{tpu_custom_call.1} parent=1 // pred_region
      %s43 = ssub.s32 2048, 2048
      %44 = vsyncadd [#allocation6], %s43
      %s45 = sshll.u32 [#allocation5], 4
      %s46 = int_to_ptr.vmem [resolvable:$true] %s45
      %51 = dma.hbm_to_vmem [thread:$0]  %s2, 2048, %s46, [#allocation6], 128, 128, 8
    $region13: #{tpu_custom_call.1} parent=1 // pred_fallthru
      _
    // Predicated region
    $region14: #{tpu_custom_call.1} parent=1 // pred_check
      _
    $region15: #{tpu_custom_call.1} parent=1 // pred_check_branch
      %53 = sbr.rel (0) target = $region17
    $region16: #{tpu_custom_call.1} parent=1 // pred_region
      %s55 = ssub.s32 2048, 2048
      %56 = vsyncadd [#allocation6], %s55
      %s57 = sshll.u32 [#allocation7], 4
      %s58 = int_to_ptr.vmem [resolvable:$true] %s57
      %63 = dma.hbm_to_vmem [thread:$0]  %s3, 2048, %s58, [#allocation6], 128, 128, 8
    $region17: #{tpu_custom_call.1} parent=1 // pred_fallthru
      _
    // Predicated region
    $region18: #{tpu_custom_call.1} parent=1 // pred_check
      _
    $region19: #{tpu_custom_call.1} parent=1 // pred_check_branch
      %65 = sbr.rel (0) target = $region21
    $region20: #{tpu_custom_call.1} parent=1 // pred_region
      %s67 = ssub.s32 2048, 2048
      %68 = vsyncadd [#allocation9], %s67
      %s69 = sshll.u32 [#allocation8], 4
      %s70 = int_to_ptr.vmem [resolvable:$true] %s69
      %75 = dma.hbm_to_vmem [thread:$0]  %s4, 2048, %s70, [#allocation9], 128, 128, 8
    $region21: #{tpu_custom_call.1} parent=1 // pred_fallthru
      _
    // Predicated region
    $region22: #{tpu_custom_call.1} parent=1 // pred_check
      _
    $region23: #{tpu_custom_call.1} parent=1 // pred_check_branch
      %77 = sbr.rel (0) target = $region25
    $region24: #{tpu_custom_call.1} parent=1 // pred_region
      %s79 = ssub.s32 2048, 2048
      %80 = vsyncadd [#allocation9], %s79
      %s81 = sshll.u32 [#allocation10], 4
      %s82 = int_to_ptr.vmem [resolvable:$true] %s81
      %87 = dma.hbm_to_vmem [thread:$0]  %s5, 2048, %s82, [#allocation9], 128, 128, 8
    $region25: #{tpu_custom_call.1} parent=1 // pred_fallthru
      _
    // Predicated region
    $region26: #{tpu_custom_call.1} parent=1 // pred_check
      _
    $region27: #{tpu_custom_call.1} parent=1 // pred_check_branch
      %89 = sbr.rel (0) target = $region29
    $region28: #{tpu_custom_call.1} parent=1 // pred_region
      %s91 = ssub.s32 128, 128
      %92 = vsyncadd [#allocation12], %s91
      %s94 = sshll.u32 [#allocation11], 4
      %s95 = int_to_ptr.vmem [resolvable:$true] %s94
      %97 = dma.hbm_to_vmem [thread:$0]  %s6, 128, %s95, [#allocation12]
    $region29: #{tpu_custom_call.1} parent=1 // pred_fallthru
      _
    // Predicated region
    $region30: #{tpu_custom_call.1} parent=1 // pred_check
      _
    $region31: #{tpu_custom_call.1} parent=1 // pred_check_branch
      %99 = sbr.rel (0) target = $region33
    $region32: #{tpu_custom_call.1} parent=1 // pred_region
      %s101 = ssub.s32 128, 128
      %102 = vsyncadd [#allocation12], %s101
      %s104 = sshll.u32 [#allocation13], 4
      %s105 = int_to_ptr.vmem [resolvable:$true] %s104
      %107 = dma.hbm_to_vmem [thread:$0]  %s7, 128, %s105, [#allocation12]
    $region33: #{tpu_custom_call.1} parent=1 // pred_fallthru
      _
    // Predicated region
    $region34: #{tpu_custom_call.1} parent=1 // pred_check
      _
    $region35: #{tpu_custom_call.1} parent=1 // pred_check_branch
      %109 = sbr.rel (0) target = $region37
    $region36: #{tpu_custom_call.1} parent=1 // pred_region
      %s111 = ssub.s32 128, 128
      %112 = vsyncadd [#allocation15], %s111
      %s114 = sshll.u32 [#allocation14], 4
      %s115 = int_to_ptr.vmem [resolvable:$true] %s114
      %117 = dma.hbm_to_vmem [thread:$0]  %s8, 128, %s115, [#allocation15]
    $region37: #{tpu_custom_call.1} parent=1 // pred_fallthru
      _
    // Predicated region
    $region38: #{tpu_custom_call.1} parent=1 // pred_check
      _
    $region39: #{tpu_custom_call.1} parent=1 // pred_check_branch
      %119 = sbr.rel (0) target = $region41
    $region40: #{tpu_custom_call.1} parent=1 // pred_region
      _
    $region41: #{tpu_custom_call.1} parent=1 // pred_fallthru
      _
    // Predicated region
    $region42: #{tpu_custom_call.1} parent=1 // pred_check
      _
    $region43: #{tpu_custom_call.1} parent=1 // pred_check_branch
      %121 = sbr.rel (0) target = $region45
    $region44: #{tpu_custom_call.1} parent=1 // pred_region
      _
    $region45: #{tpu_custom_call.1} parent=1 // pred_fallthru
      _
    // Predicated region
    $region46: #{tpu_custom_call.1} parent=1 // pred_check
      _
    $region47: #{tpu_custom_call.1} parent=1 // pred_check_branch
      %123 = sbr.rel (0) target = $region49
    $region48: #{tpu_custom_call.1} parent=1 // pred_region
      %s125 = ssub.s32 2048, 2048
      %126 = vsyncadd [#allocation15], %s125
      %s127 = sshll.u32 [#allocation16], 4
      %s128 = int_to_ptr.vmem [resolvable:$true] %s127
      %133 = dma.hbm_to_vmem [thread:$0]  %s11, 2048, %s128, [#allocation15], 128, 128, 8
    $region49: #{tpu_custom_call.1} parent=1 // pred_fallthru
      _
    // Predicated region
    $region50: #{tpu_custom_call.1} parent=1 // pred_check
      _
    $region51: #{tpu_custom_call.1} parent=1 // pred_check_branch
      %135 = sbr.rel (0) target = $region53
    $region52: #{tpu_custom_call.1} parent=1 // pred_region
      %s137 = ssub.s32 2048, 2048
      %138 = vsyncadd [#allocation18], %s137
      %s139 = sshll.u32 [#allocation17], 4
      %s140 = int_to_ptr.vmem [resolvable:$true] %s139
      %145 = dma.hbm_to_vmem [thread:$0]  %s12, 2048, %s140, [#allocation18], 128, 128, 8
    $region53: #{tpu_custom_call.1} parent=1 // pred_fallthru
      _
    // Predicated region
    $region54: #{tpu_custom_call.1} parent=1 // pred_check
      _
    $region55: #{tpu_custom_call.1} parent=1 // pred_check_branch
      %147 = sbr.rel (0) target = $region57
    $region56: #{tpu_custom_call.1} parent=1 // pred_region
      %s149 = ssub.s32 2048, 2048
      %150 = vsyncadd [#allocation18], %s149
      %s151 = sshll.u32 [#allocation19], 4
      %s152 = int_to_ptr.vmem [resolvable:$true] %s151
      %157 = dma.hbm_to_vmem [thread:$0]  %s13, 2048, %s152, [#allocation18], 128, 128, 8
    $region57: #{tpu_custom_call.1} parent=1 // pred_fallthru
      _
    // Predicated region
    $region58: #{tpu_custom_call.1} parent=1 // pred_check
      _
    $region59: #{tpu_custom_call.1} parent=1 // pred_check_branch
      %159 = sbr.rel (0) target = $region61
    $region60: #{tpu_custom_call.1} parent=1 // pred_region
      %160 = dma.done [#allocation3], 256
    $region61: #{tpu_custom_call.1} parent=1 // pred_fallthru
      _
    // Predicated region
    $region62: #{tpu_custom_call.1} parent=1 // pred_check
      _
    $region63: #{tpu_custom_call.1} parent=1 // pred_check_branch
      %162 = sbr.rel (0) target = $region65
    $region64: #{tpu_custom_call.1} parent=1 // pred_region
      %163 = dma.done [#allocation6], 2048
    $region65: #{tpu_custom_call.1} parent=1 // pred_fallthru
      _
    // Predicated region
    $region66: #{tpu_custom_call.1} parent=1 // pred_check
      _
    $region67: #{tpu_custom_call.1} parent=1 // pred_check_branch
      %165 = sbr.rel (0) target = $region69
    $region68: #{tpu_custom_call.1} parent=1 // pred_region
      %166 = dma.done [#allocation6], 2048
    $region69: #{tpu_custom_call.1} parent=1 // pred_fallthru
      _
    // Predicated region
    $region70: #{tpu_custom_call.1} parent=1 // pred_check
      _
    $region71: #{tpu_custom_call.1} parent=1 // pred_check_branch
      %168 = sbr.rel (0) target = $region73
    $region72: #{tpu_custom_call.1} parent=1 // pred_region
      %169 = dma.done [#allocation9], 2048
    $region73: #{tpu_custom_call.1} parent=1 // pred_fallthru
      _
    // Predicated region
    $region74: #{tpu_custom_call.1} parent=1 // pred_check
      _
    $region75: #{tpu_custom_call.1} parent=1 // pred_check_branch
      %171 = sbr.rel (0) target = $region77
    $region76: #{tpu_custom_call.1} parent=1 // pred_region
      %172 = dma.done [#allocation9], 2048
    $region77: #{tpu_custom_call.1} parent=1 // pred_fallthru
      _
    // Predicated region
    $region78: #{tpu_custom_call.1} parent=1 // pred_check
      _
    $region79: #{tpu_custom_call.1} parent=1 // pred_check_branch
      %174 = sbr.rel (0) target = $region81
    $region80: #{tpu_custom_call.1} parent=1 // pred_region
      %175 = dma.done [#allocation12], 128
    $region81: #{tpu_custom_call.1} parent=1 // pred_fallthru
      _
    // Predicated region
    $region82: #{tpu_custom_call.1} parent=1 // pred_check
      _
    $region83: #{tpu_custom_call.1} parent=1 // pred_check_branch
      %177 = sbr.rel (0) target = $region85
    $region84: #{tpu_custom_call.1} parent=1 // pred_region
      %178 = dma.done [#allocation12], 128
    $region85: #{tpu_custom_call.1} parent=1 // pred_fallthru
      _
    // Predicated region
    $region86: #{tpu_custom_call.1} parent=1 // pred_check
      _
    $region87: #{tpu_custom_call.1} parent=1 // pred_check_branch
      %180 = sbr.rel (0) target = $region89
    $region88: #{tpu_custom_call.1} parent=1 // pred_region
      %181 = dma.done [#allocation15], 128
    $region89: #{tpu_custom_call.1} parent=1 // pred_fallthru
      _
    // Predicated region
    $region90: #{tpu_custom_call.1} parent=1 // pred_check
      _
    $region91: #{tpu_custom_call.1} parent=1 // pred_check_branch
      %183 = sbr.rel (0) target = $region93
    $region92: #{tpu_custom_call.1} parent=1 // pred_region
      %184 = dma.done [#allocation15], 2048
    $region93: #{tpu_custom_call.1} parent=1 // pred_fallthru
      _
    // Predicated region
    $region94: #{tpu_custom_call.1} parent=1 // pred_check
      _
    $region95: #{tpu_custom_call.1} parent=1 // pred_check_branch
      %186 = sbr.rel (0) target = $region97
    $region96: #{tpu_custom_call.1} parent=1 // pred_region
      %187 = dma.done [#allocation18], 2048
    $region97: #{tpu_custom_call.1} parent=1 // pred_fallthru
      _
    // Predicated region
    $region98: #{tpu_custom_call.1} parent=1 // pred_check
      _
    $region99: #{tpu_custom_call.1} parent=1 // pred_check_branch
      %189 = sbr.rel (0) target = $region101
    $region100: #{tpu_custom_call.1} parent=1 // pred_region
      %190 = dma.done [#allocation18], 2048
    $region101: #{tpu_custom_call.1} parent=1 // pred_fallthru
      _
    %v191 = vld [vmem:[#allocation2] sm:$0xff]
    %v192 = vld [vmem:[#allocation2 + $0x8] sm:$0xff]
    %v193 = vld [vmem:[%s1] sm:$0x1]
    %v194 = vmul.f32 %v191, %v191
    %v195 = vmul.f32 %v192, %v192
    %196 = vadd.xlane.f32.xlu0 %v194
    %v197 = vpop.xlane.xlu0 %196
    %198 = vadd.xlane.f32.xlu0 %v195
    %v199 = vpop.xlane.xlu0 %198
    %v200 = vmul.f32 %v197, 0.03125
    %v201 = vmul.f32 %v199, 0.03125
    %v202 = vadd.f32 %v200, 1e-05
    %v203 = vadd.f32 %v201, 1e-05
    %v204 = vrsqrt.pop %v202
    %v205 = vrsqrt.pop %v203
    %v206 = vmul.f32 %v191, %v204
    %v207 = vmul.f32 %v192, %v205
    %v209 = vlaneseq
    %v210 = vshrl.u32 %v209, 7
    %v211 = vsub.s32 0, %v210
    %v212 = vrot.slane %v193, %v211
    %v214 = vmul.f32 %v206, %v212
    %v215 = vmul.f32 %v207, %v212
    %v216 = vld [vmem:[#allocation5] sm:$0xff]
    %v217 = vld [vmem:[#allocation5 + $0x8] sm:$0xff]
    %v218 = vld [vmem:[#allocation5 + $0x10] sm:$0xff]
    %v219 = vld [vmem:[#allocation5 + $0x18] sm:$0xff]
    %v220 = vld [vmem:[#allocation5 + $0x20] sm:$0xff]
    %v221 = vld [vmem:[#allocation5 + $0x28] sm:$0xff]
    %v222 = vld [vmem:[#allocation5 + $0x30] sm:$0xff]
    %v223 = vld [vmem:[#allocation5 + $0x38] sm:$0xff]
    %v224 = vld [vmem:[#allocation5 + $0x40] sm:$0xff]
    %v225 = vld [vmem:[#allocation5 + $0x48] sm:$0xff]
    %v226 = vld [vmem:[#allocation5 + $0x50] sm:$0xff]
    %v227 = vld [vmem:[#allocation5 + $0x58] sm:$0xff]
    %v228 = vld [vmem:[#allocation5 + $0x60] sm:$0xff]
    %v229 = vld [vmem:[#allocation5 + $0x68] sm:$0xff]
    %v230 = vld [vmem:[#allocation5 + $0x70] sm:$0xff]
    %v231 = vld [vmem:[#allocation5 + $0x78] sm:$0xff]
    %232 = vmatprep.subr.mxu0 0.0
    %233 = vmatpush1.msra.mxu0 %v216
    %234 = vmatprep.subr.mxu0 0.0
    %235 = vmatpush1.msra.mxu0 %v217
    %236 = vmatprep.subr.mxu0 0.0
    %237 = vmatpush1.msra.mxu0 %v218
    %238 = vmatprep.subr.mxu0 0.0
    %239 = vmatpush1.msra.mxu0 %v219
    %240 = vmatprep.subr.mxu0 0.0
    %241 = vmatpush1.msra.mxu0 %v220
    %242 = vmatprep.subr.mxu0 0.0
    %243 = vmatpush1.msra.mxu0 %v221
    %244 = vmatprep.subr.mxu0 0.0
    %245 = vmatpush1.msra.mxu0 %v222
    %246 = vmatprep.subr.mxu0 0.0
    %247 = vmatpush1.msra.mxu0 %v223
    %248 = vmatprep.subr.mxu0 0.0
    %249 = vmatpush1.msra.mxu0 %v224
    %250 = vmatprep.subr.mxu0 0.0
    %251 = vmatpush1.msra.mxu0 %v225
    %252 = vmatprep.subr.mxu0 0.0
    %253 = vmatpush1.msra.mxu0 %v226
    %254 = vmatprep.subr.mxu0 0.0
    %255 = vmatpush1.msra.mxu0 %v227
    %256 = vmatprep.subr.mxu0 0.0
    %257 = vmatpush1.msra.mxu0 %v228
    %258 = vmatprep.subr.mxu0 0.0
    %259 = vmatpush1.msra.mxu0 %v229
    %260 = vmatprep.subr.mxu0 0.0
    %261 = vmatpush1.msra.mxu0 %v230
    %262 = vmatprep.subr.mxu0 0.0
    %263 = vmatpush1.msra.mxu0 %v231
    %264 = vmatprep.subr.mxu0 0.0
    %265 = vmatpush1.msra.mxu0 0.0
    %266 = vmatprep.subr.mxu0 0.0
    %267 = vmatpush1.msra.mxu0 0.0
    %268 = vmatprep.subr.mxu0 0.0
    %269 = vmatpush1.msra.mxu0 0.0
    %270 = vmatprep.subr.mxu0 0.0
    %271 = vmatpush1.msra.mxu0 0.0
    %272 = vmatprep.subr.mxu0 0.0
    %273 = vmatpush1.msra.mxu0 0.0
    %274 = vmatprep.subr.mxu0 0.0
    %275 = vmatpush1.msra.mxu0 0.0
    %276 = vmatprep.subr.mxu0 0.0
    %277 = vmatpush1.msra.mxu0 0.0
    %278 = vmatprep.subr.mxu0 0.0
    %279 = vmatpush1.msra.mxu0 0.0
    %280 = vmatprep.subr.mxu0 0.0
    %281 = vmatpush1.msra.mxu0 0.0
    %282 = vmatprep.subr.mxu0 0.0
    %283 = vmatpush1.msra.mxu0 0.0
    %284 = vmatprep.subr.mxu0 0.0
    %285 = vmatpush1.msra.mxu0 0.0
    %286 = vmatprep.subr.mxu0 0.0
    %287 = vmatpush1.msra.mxu0 0.0
    %288 = vmatprep.subr.mxu0 0.0
    %289 = vmatpush1.msra.mxu0 0.0
    %290 = vmatprep.subr.mxu0 0.0
    %291 = vmatpush1.msra.mxu0 0.0
    %292 = vmatprep.subr.mxu0 0.0
    %293 = vmatpush1.msra.mxu0 0.0
    %294 = vmatprep.subr.mxu0 0.0
    %295 = vmatpush1.msra.mxu0 0.0
    %296 = vmatprep.mubr.f32.mxu0 0.0
    %297 = vmatmul.mubr.f32.gmra.mrb[0].mxu0 %v214
    %v298 = vpop.f32.mrb[0].mxu0
    %v299 = vadd.f32 0.0, %v298
    %v300 = vpop.f32.mrb[0].mxu0
    %301 = vmatprep.mubr.f32.mxu0 0.0
    %302 = vmatmul.mubr.f32.gmra.mrb[0].mxu0 %v215
    %v303 = vpop.f32.mrb[0].mxu0
    %v304 = vadd.f32 0.0, %v303
    %v305 = vpop.f32.mrb[0].mxu0
    %306 = vdwg.mxu0
    %v307 = vld [vmem:[#allocation7] sm:$0xff]
    %v308 = vld [vmem:[#allocation7 + $0x8] sm:$0xff]
    %v309 = vld [vmem:[#allocation7 + $0x10] sm:$0xff]
    %v310 = vld [vmem:[#allocation7 + $0x18] sm:$0xff]
    %v311 = vld [vmem:[#allocation7 + $0x20] sm:$0xff]
    %v312 = vld [vmem:[#allocation7 + $0x28] sm:$0xff]
    %v313 = vld [vmem:[#allocation7 + $0x30] sm:$0xff]
    %v314 = vld [vmem:[#allocation7 + $0x38] sm:$0xff]
    %v315 = vld [vmem:[#allocation7 + $0x40] sm:$0xff]
    %v316 = vld [vmem:[#allocation7 + $0x48] sm:$0xff]
    %v317 = vld [vmem:[#allocation7 + $0x50] sm:$0xff]
    %v318 = vld [vmem:[#allocation7 + $0x58] sm:$0xff]
    %v319 = vld [vmem:[#allocation7 + $0x60] sm:$0xff]
    %v320 = vld [vmem:[#allocation7 + $0x68] sm:$0xff]
    %v321 = vld [vmem:[#allocation7 + $0x70] sm:$0xff]
    %v322 = vld [vmem:[#allocation7 + $0x78] sm:$0xff]
    %323 = vmatprep.subr.mxu0 0.0
    %324 = vmatpush1.msra.mxu0 %v307
    %325 = vmatprep.subr.mxu0 0.0
    %326 = vmatpush1.msra.mxu0 %v308
    %327 = vmatprep.subr.mxu0 0.0
    %328 = vmatpush1.msra.mxu0 %v309
    %329 = vmatprep.subr.mxu0 0.0
    %330 = vmatpush1.msra.mxu0 %v310
    %331 = vmatprep.subr.mxu0 0.0
    %332 = vmatpush1.msra.mxu0 %v311
    %333 = vmatprep.subr.mxu0 0.0
    %334 = vmatpush1.msra.mxu0 %v312
    %335 = vmatprep.subr.mxu0 0.0
    %336 = vmatpush1.msra.mxu0 %v313
    %337 = vmatprep.subr.mxu0 0.0
    %338 = vmatpush1.msra.mxu0 %v314
    %339 = vmatprep.subr.mxu0 0.0
    %340 = vmatpush1.msra.mxu0 %v315
    %341 = vmatprep.subr.mxu0 0.0
    %342 = vmatpush1.msra.mxu0 %v316
    %343 = vmatprep.subr.mxu0 0.0
    %344 = vmatpush1.msra.mxu0 %v317
    %345 = vmatprep.subr.mxu0 0.0
    %346 = vmatpush1.msra.mxu0 %v318
    %347 = vmatprep.subr.mxu0 0.0
    %348 = vmatpush1.msra.mxu0 %v319
    %349 = vmatprep.subr.mxu0 0.0
    %350 = vmatpush1.msra.mxu0 %v320
    %351 = vmatprep.subr.mxu0 0.0
    %352 = vmatpush1.msra.mxu0 %v321
    %353 = vmatprep.subr.mxu0 0.0
    %354 = vmatpush1.msra.mxu0 %v322
    %355 = vmatprep.subr.mxu0 0.0
    %356 = vmatpush1.msra.mxu0 0.0
    %357 = vmatprep.subr.mxu0 0.0
    %358 = vmatpush1.msra.mxu0 0.0
    %359 = vmatprep.subr.mxu0 0.0
    %360 = vmatpush1.msra.mxu0 0.0
    %361 = vmatprep.subr.mxu0 0.0
    %362 = vmatpush1.msra.mxu0 0.0
    %363 = vmatprep.subr.mxu0 0.0
    %364 = vmatpush1.msra.mxu0 0.0
    %365 = vmatprep.subr.mxu0 0.0
    %366 = vmatpush1.msra.mxu0 0.0
    %367 = vmatprep.subr.mxu0 0.0
    %368 = vmatpush1.msra.mxu0 0.0
    %369 = vmatprep.subr.mxu0 0.0
    %370 = vmatpush1.msra.mxu0 0.0
    %371 = vmatprep.subr.mxu0 0.0
    %372 = vmatpush1.msra.mxu0 0.0
    %373 = vmatprep.subr.mxu0 0.0
    %374 = vmatpush1.msra.mxu0 0.0
    %375 = vmatprep.subr.mxu0 0.0
    %376 = vmatpush1.msra.mxu0 0.0
    %377 = vmatprep.subr.mxu0 0.0
    %378 = vmatpush1.msra.mxu0 0.0
    %379 = vmatprep.subr.mxu0 0.0
    %380 = vmatpush1.msra.mxu0 0.0
    %381 = vmatprep.subr.mxu0 0.0
    %382 = vmatpush1.msra.mxu0 0.0
    %383 = vmatprep.subr.mxu0 0.0
    %384 = vmatpush1.msra.mxu0 0.0
    %385 = vmatprep.subr.mxu0 0.0
    %386 = vmatpush1.msra.mxu0 0.0
    %387 = vmatprep.mubr.f32.mxu0 0.0
    %388 = vmatmul.mubr.f32.gmra.mrb[0].mxu0 %v214
    %v389 = vpop.f32.mrb[0].mxu0
    %v390 = vadd.f32 0.0, %v389
    %v391 = vpop.f32.mrb[0].mxu0
    %392 = vmatprep.mubr.f32.mxu0 0.0
    %393 = vmatmul.mubr.f32.gmra.mrb[0].mxu0 %v215
    %v394 = vpop.f32.mrb[0].mxu0
    %v395 = vadd.f32 0.0, %v394
    %v396 = vpop.f32.mrb[0].mxu0
    %397 = vdwg.mxu0
    %v398 = vld [vmem:[#allocation8] sm:$0xff]
    %v399 = vld [vmem:[#allocation8 + $0x8] sm:$0xff]
    %v400 = vld [vmem:[#allocation8 + $0x10] sm:$0xff]
    %v401 = vld [vmem:[#allocation8 + $0x18] sm:$0xff]
    %v402 = vld [vmem:[#allocation8 + $0x20] sm:$0xff]
    %v403 = vld [vmem:[#allocation8 + $0x28] sm:$0xff]
    %v404 = vld [vmem:[#allocation8 + $0x30] sm:$0xff]
    %v405 = vld [vmem:[#allocation8 + $0x38] sm:$0xff]
    %v406 = vld [vmem:[#allocation8 + $0x40] sm:$0xff]
    %v407 = vld [vmem:[#allocation8 + $0x48] sm:$0xff]
    %v408 = vld [vmem:[#allocation8 + $0x50] sm:$0xff]
    %v409 = vld [vmem:[#allocation8 + $0x58] sm:$0xff]
    %v410 = vld [vmem:[#allocation8 + $0x60] sm:$0xff]
    %v411 = vld [vmem:[#allocation8 + $0x68] sm:$0xff]
    %v412 = vld [vmem:[#allocation8 + $0x70] sm:$0xff]
    %v413 = vld [vmem:[#allocation8 + $0x78] sm:$0xff]
    %414 = vmatprep.subr.mxu0 0.0
    %415 = vmatpush1.msra.mxu0 %v398
    %416 = vmatprep.subr.mxu0 0.0
    %417 = vmatpush1.msra.mxu0 %v399
    %418 = vmatprep.subr.mxu0 0.0
    %419 = vmatpush1.msra.mxu0 %v400
    %420 = vmatprep.subr.mxu0 0.0
    %421 = vmatpush1.msra.mxu0 %v401
    %422 = vmatprep.subr.mxu0 0.0
    %423 = vmatpush1.msra.mxu0 %v402
    %424 = vmatprep.subr.mxu0 0.0
    %425 = vmatpush1.msra.mxu0 %v403
    %426 = vmatprep.subr.mxu0 0.0
    %427 = vmatpush1.msra.mxu0 %v404
    %428 = vmatprep.subr.mxu0 0.0
    %429 = vmatpush1.msra.mxu0 %v405
    %430 = vmatprep.subr.mxu0 0.0
    %431 = vmatpush1.msra.mxu0 %v406
    %432 = vmatprep.subr.mxu0 0.0
    %433 = vmatpush1.msra.mxu0 %v407
    %434 = vmatprep.subr.mxu0 0.0
    %435 = vmatpush1.msra.mxu0 %v408
    %436 = vmatprep.subr.mxu0 0.0
    %437 = vmatpush1.msra.mxu0 %v409
    %438 = vmatprep.subr.mxu0 0.0
    %439 = vmatpush1.msra.mxu0 %v410
    %440 = vmatprep.subr.mxu0 0.0
    %441 = vmatpush1.msra.mxu0 %v411
    %442 = vmatprep.subr.mxu0 0.0
    %443 = vmatpush1.msra.mxu0 %v412
    %444 = vmatprep.subr.mxu0 0.0
    %445 = vmatpush1.msra.mxu0 %v413
    %446 = vmatprep.subr.mxu0 0.0
    %447 = vmatpush1.msra.mxu0 0.0
    %448 = vmatprep.subr.mxu0 0.0
    %449 = vmatpush1.msra.mxu0 0.0
    %450 = vmatprep.subr.mxu0 0.0
    %451 = vmatpush1.msra.mxu0 0.0
    %452 = vmatprep.subr.mxu0 0.0
    %453 = vmatpush1.msra.mxu0 0.0
    %454 = vmatprep.subr.mxu0 0.0
    %455 = vmatpush1.msra.mxu0 0.0
    %456 = vmatprep.subr.mxu0 0.0
    %457 = vmatpush1.msra.mxu0 0.0
    %458 = vmatprep.subr.mxu0 0.0
    %459 = vmatpush1.msra.mxu0 0.0
    %460 = vmatprep.subr.mxu0 0.0
    %461 = vmatpush1.msra.mxu0 0.0
    %462 = vmatprep.subr.mxu0 0.0
    %463 = vmatpush1.msra.mxu0 0.0
    %464 = vmatprep.subr.mxu0 0.0
    %465 = vmatpush1.msra.mxu0 0.0
    %466 = vmatprep.subr.mxu0 0.0
    %467 = vmatpush1.msra.mxu0 0.0
    %468 = vmatprep.subr.mxu0 0.0
    %469 = vmatpush1.msra.mxu0 0.0
    %470 = vmatprep.subr.mxu0 0.0
    %471 = vmatpush1.msra.mxu0 0.0
    %472 = vmatprep.subr.mxu0 0.0
    %473 = vmatpush1.msra.mxu0 0.0
    %474 = vmatprep.subr.mxu0 0.0
    %475 = vmatpush1.msra.mxu0 0.0
    %476 = vmatprep.subr.mxu0 0.0
    %477 = vmatpush1.msra.mxu0 0.0
    %478 = vmatprep.mubr.f32.mxu0 0.0
    %479 = vmatmul.mubr.f32.gmra.mrb[0].mxu0 %v214
    %v480 = vpop.f32.mrb[0].mxu0
    %v481 = vadd.f32 0.0, %v480
    %v482 = vpop.f32.mrb[0].mxu0
    %483 = vmatprep.mubr.f32.mxu0 0.0
    %484 = vmatmul.mubr.f32.gmra.mrb[0].mxu0 %v215
    %v485 = vpop.f32.mrb[0].mxu0
    %v486 = vadd.f32 0.0, %v485
    %v487 = vpop.f32.mrb[0].mxu0
    %488 = vdwg.mxu0
    %v489 = vld [vmem:[#allocation11] sm:$0xff]
    %v490 = vld [vmem:[#allocation13] sm:$0xff]
    %v491 = vld [vmem:[#allocation14] sm:$0xff]
    %492 = vrot.lane.b32.xlu0 %v299, 127
    %v493 = vpop.permute.xlu0 %492
    %494 = vrot.lane.b32.xlu0 %v304, 127
    %v495 = vpop.permute.xlu0 %494
    %496 = vrot.lane.b32.xlu0 %v299, 1
    %v497 = vpop.permute.xlu0 %496
    %498 = vrot.lane.b32.xlu0 %v304, 1
    %v499 = vpop.permute.xlu0 %498
    %v500 = vmul.f32 %v299, %v489
    %v501 = vmul.f32 %v304, %v489
    %v502 = vmul.f32 %v493, %v490
    %v503 = vmul.f32 %v495, %v490
    %v504 = vadd.f32 %v500, %v502
    %v505 = vadd.f32 %v501, %v503
    %v506 = vmul.f32 %v497, %v491
    %v507 = vmul.f32 %v499, %v491
    %v508 = vadd.f32 %v504, %v506
    %v509 = vadd.f32 %v505, %v507
    %510 = vrot.lane.b32.xlu0 %v390, 127
    %v511 = vpop.permute.xlu0 %510
    %512 = vrot.lane.b32.xlu0 %v395, 127
    %v513 = vpop.permute.xlu0 %512
    %514 = vrot.lane.b32.xlu0 %v390, 1
    %v515 = vpop.permute.xlu0 %514
    %516 = vrot.lane.b32.xlu0 %v395, 1
    %v517 = vpop.permute.xlu0 %516
    %v518 = vmul.f32 %v390, %v489
    %v519 = vmul.f32 %v395, %v489
    %v520 = vmul.f32 %v511, %v490
    %v521 = vmul.f32 %v513, %v490
    %v522 = vadd.f32 %v518, %v520
    %v523 = vadd.f32 %v519, %v521
    %v524 = vmul.f32 %v515, %v491
    %v525 = vmul.f32 %v517, %v491
    %v526 = vadd.f32 %v522, %v524
    %v527 = vadd.f32 %v523, %v525
    %v528 = vld [vmem:[%s9] sm:$0xff]
    %v529 = vld [vmem:[%s9 + $0x8] sm:$0xff]
    %v530 = vld [vmem:[%s9 + $0x10] sm:$0xff]
    %v531 = vld [vmem:[%s9 + $0x18] sm:$0xff]
    %v532 = vmul.f32 %v508, %v528
    %v533 = vmul.f32 %v508, %v529
    %v534 = vmul.f32 %v508, %v530
    %v535 = vmul.f32 %v508, %v531
    %v536 = vmul.f32 %v509, %v528
    %v537 = vmul.f32 %v509, %v529
    %v538 = vmul.f32 %v509, %v530
    %v539 = vmul.f32 %v509, %v531
    %v540 = vmul.f32 %v526, %v528
    %v541 = vmul.f32 %v526, %v529
    %v542 = vmul.f32 %v526, %v530
    %v543 = vmul.f32 %v526, %v531
    %v544 = vmul.f32 %v527, %v528
    %v545 = vmul.f32 %v527, %v529
    %v546 = vmul.f32 %v527, %v530
    %v547 = vmul.f32 %v527, %v531
    %v548 = vmul.f32 %v481, %v528
    %v549 = vmul.f32 %v481, %v529
    %v550 = vmul.f32 %v481, %v530
    %v551 = vmul.f32 %v481, %v531
    %v552 = vmul.f32 %v486, %v528
    %v553 = vmul.f32 %v486, %v529
    %v554 = vmul.f32 %v486, %v530
    %v555 = vmul.f32 %v486, %v531
    %556 = vmatprep.subr.mxu0 0.0
    %557 = vmatpush1.xpose.msra.mxu0 %v540
    %558 = vmatprep.subr.mxu0 0.0
    %559 = vmatpush1.xpose.msra.mxu0 0.0
    %560 = vmatprep.subr.mxu0 0.0
    %561 = vmatpush1.xpose.msra.mxu0 0.0
    %562 = vmatprep.subr.mxu0 0.0
    %563 = vmatpush1.xpose.msra.mxu0 0.0
    %564 = vmatprep.subr.mxu0 0.0
    %565 = vmatpush1.xpose.msra.mxu0 0.0
    %566 = vmatprep.subr.mxu0 0.0
    %567 = vmatpush1.xpose.msra.mxu0 0.0
    %568 = vmatprep.subr.mxu0 0.0
    %569 = vmatpush1.xpose.msra.mxu0 0.0
    %570 = vmatprep.subr.mxu0 0.0
    %571 = vmatpush1.xpose.msra.mxu0 0.0
    %572 = vmatprep.subr.mxu0 0.0
    %573 = vmatpush1.xpose.msra.mxu0 0.0
    %574 = vmatprep.subr.mxu0 0.0
    %575 = vmatpush1.xpose.msra.mxu0 0.0
    %576 = vmatprep.subr.mxu0 0.0
    %577 = vmatpush1.xpose.msra.mxu0 0.0
    %578 = vmatprep.subr.mxu0 0.0
    %579 = vmatpush1.xpose.msra.mxu0 0.0
    %580 = vmatprep.subr.mxu0 0.0
    %581 = vmatpush1.xpose.msra.mxu0 0.0
    %582 = vmatprep.subr.mxu0 0.0
    %583 = vmatpush1.xpose.msra.mxu0 0.0
    %584 = vmatprep.subr.mxu0 0.0
    %585 = vmatpush1.xpose.msra.mxu0 0.0
    %586 = vmatprep.subr.mxu0 0.0
    %587 = vmatpush1.xpose.msra.mxu0 0.0
    %588 = vmatprep.subr.mxu0 0.0
    %589 = vmatpush1.xpose.msra.mxu0 0.0
    %590 = vmatprep.subr.mxu0 0.0
    %591 = vmatpush1.xpose.msra.mxu0 0.0
    %592 = vmatprep.subr.mxu0 0.0
    %593 = vmatpush1.xpose.msra.mxu0 0.0
    %594 = vmatprep.subr.mxu0 0.0
    %595 = vmatpush1.xpose.msra.mxu0 0.0
    %596 = vmatprep.subr.mxu0 0.0
    %597 = vmatpush1.xpose.msra.mxu0 0.0
    %598 = vmatprep.subr.mxu0 0.0
    %599 = vmatpush1.xpose.msra.mxu0 0.0
    %600 = vmatprep.subr.mxu0 0.0
    %601 = vmatpush1.xpose.msra.mxu0 0.0
    %602 = vmatprep.subr.mxu0 0.0
    %603 = vmatpush1.xpose.msra.mxu0 0.0
    %604 = vmatprep.subr.mxu0 0.0
    %605 = vmatpush1.xpose.msra.mxu0 0.0
    %606 = vmatprep.subr.mxu0 0.0
    %607 = vmatpush1.xpose.msra.mxu0 0.0
    %608 = vmatprep.subr.mxu0 0.0
    %609 = vmatpush1.xpose.msra.mxu0 0.0
    %610 = vmatprep.subr.mxu0 0.0
    %611 = vmatpush1.xpose.msra.mxu0 0.0
    %612 = vmatprep.subr.mxu0 0.0
    %613 = vmatpush1.xpose.msra.mxu0 0.0
    %614 = vmatprep.subr.mxu0 0.0
    %615 = vmatpush1.xpose.msra.mxu0 0.0
    %616 = vmatprep.subr.mxu0 0.0
    %617 = vmatpush1.xpose.msra.mxu0 0.0
    %618 = vmatprep.subr.mxu0 0.0
    %619 = vmatpush1.xpose.msra.mxu0 0.0
    %620 = vmatprep.mubr.f32.mxu0 0.0
    %621 = vmatmul.mubr.f32.gmra.mrb[0].mxu0 %v532
    %v622 = vpop.f32.mrb[0].mxu0
    %v623 = vadd.f32 0.0, %v622
    %v624 = vpop.f32.mrb[0].mxu0
    %625 = vdwg.mxu0
    %626 = vmatprep.subr.mxu0 0.0
    %627 = vmatpush1.xpose.msra.mxu0 %v541
    %628 = vmatprep.subr.mxu0 0.0
    %629 = vmatpush1.xpose.msra.mxu0 0.0
    %630 = vmatprep.subr.mxu0 0.0
    %631 = vmatpush1.xpose.msra.mxu0 0.0
    %632 = vmatprep.subr.mxu0 0.0
    %633 = vmatpush1.xpose.msra.mxu0 0.0
    %634 = vmatprep.subr.mxu0 0.0
    %635 = vmatpush1.xpose.msra.mxu0 0.0
    %636 = vmatprep.subr.mxu0 0.0
    %637 = vmatpush1.xpose.msra.mxu0 0.0
    %638 = vmatprep.subr.mxu0 0.0
    %639 = vmatpush1.xpose.msra.mxu0 0.0
    %640 = vmatprep.subr.mxu0 0.0
    %641 = vmatpush1.xpose.msra.mxu0 0.0
    %642 = vmatprep.subr.mxu0 0.0
    %643 = vmatpush1.xpose.msra.mxu0 0.0
    %644 = vmatprep.subr.mxu0 0.0
    %645 = vmatpush1.xpose.msra.mxu0 0.0
    %646 = vmatprep.subr.mxu0 0.0
    %647 = vmatpush1.xpose.msra.mxu0 0.0
    %648 = vmatprep.subr.mxu0 0.0
    %649 = vmatpush1.xpose.msra.mxu0 0.0
    %650 = vmatprep.subr.mxu0 0.0
    %651 = vmatpush1.xpose.msra.mxu0 0.0
    %652 = vmatprep.subr.mxu0 0.0
    %653 = vmatpush1.xpose.msra.mxu0 0.0
    %654 = vmatprep.subr.mxu0 0.0
    %655 = vmatpush1.xpose.msra.mxu0 0.0
    %656 = vmatprep.subr.mxu0 0.0
    %657 = vmatpush1.xpose.msra.mxu0 0.0
    %658 = vmatprep.subr.mxu0 0.0
    %659 = vmatpush1.xpose.msra.mxu0 0.0
    %660 = vmatprep.subr.mxu0 0.0
    %661 = vmatpush1.xpose.msra.mxu0 0.0
    %662 = vmatprep.subr.mxu0 0.0
    %663 = vmatpush1.xpose.msra.mxu0 0.0
    %664 = vmatprep.subr.mxu0 0.0
    %665 = vmatpush1.xpose.msra.mxu0 0.0
    %666 = vmatprep.subr.mxu0 0.0
    %667 = vmatpush1.xpose.msra.mxu0 0.0
    %668 = vmatprep.subr.mxu0 0.0
    %669 = vmatpush1.xpose.msra.mxu0 0.0
    %670 = vmatprep.subr.mxu0 0.0
    %671 = vmatpush1.xpose.msra.mxu0 0.0
    %672 = vmatprep.subr.mxu0 0.0
    %673 = vmatpush1.xpose.msra.mxu0 0.0
    %674 = vmatprep.subr.mxu0 0.0
    %675 = vmatpush1.xpose.msra.mxu0 0.0
    %676 = vmatprep.subr.mxu0 0.0
    %677 = vmatpush1.xpose.msra.mxu0 0.0
    %678 = vmatprep.subr.mxu0 0.0
    %679 = vmatpush1.xpose.msra.mxu0 0.0
    %680 = vmatprep.subr.mxu0 0.0
    %681 = vmatpush1.xpose.msra.mxu0 0.0
    %682 = vmatprep.subr.mxu0 0.0
    %683 = vmatpush1.xpose.msra.mxu0 0.0
    %684 = vmatprep.subr.mxu0 0.0
    %685 = vmatpush1.xpose.msra.mxu0 0.0
    %686 = vmatprep.subr.mxu0 0.0
    %687 = vmatpush1.xpose.msra.mxu0 0.0
    %688 = vmatprep.subr.mxu0 0.0
    %689 = vmatpush1.xpose.msra.mxu0 0.0
    %690 = vmatprep.mubr.f32.mxu0 0.0
    %691 = vmatmul.mubr.f32.gmra.mrb[0].mxu0 %v533
    %v692 = vpop.f32.mrb[0].mxu0
    %v693 = vadd.f32 0.0, %v692
    %v694 = vpop.f32.mrb[0].mxu0
    %695 = vdwg.mxu0
    %696 = vmatprep.subr.mxu0 0.0
    %697 = vmatpush1.xpose.msra.mxu0 %v542
    %698 = vmatprep.subr.mxu0 0.0
    %699 = vmatpush1.xpose.msra.mxu0 0.0
    %700 = vmatprep.subr.mxu0 0.0
    %701 = vmatpush1.xpose.msra.mxu0 0.0
    %702 = vmatprep.subr.mxu0 0.0
    %703 = vmatpush1.xpose.msra.mxu0 0.0
    %704 = vmatprep.subr.mxu0 0.0
    %705 = vmatpush1.xpose.msra.mxu0 0.0
    %706 = vmatprep.subr.mxu0 0.0
    %707 = vmatpush1.xpose.msra.mxu0 0.0
    %708 = vmatprep.subr.mxu0 0.0
    %709 = vmatpush1.xpose.msra.mxu0 0.0
    %710 = vmatprep.subr.mxu0 0.0
    %711 = vmatpush1.xpose.msra.mxu0 0.0
    %712 = vmatprep.subr.mxu0 0.0
    %713 = vmatpush1.xpose.msra.mxu0 0.0
    %714 = vmatprep.subr.mxu0 0.0
    %715 = vmatpush1.xpose.msra.mxu0 0.0
    %716 = vmatprep.subr.mxu0 0.0
    %717 = vmatpush1.xpose.msra.mxu0 0.0
    %718 = vmatprep.subr.mxu0 0.0
    %719 = vmatpush1.xpose.msra.mxu0 0.0
    %720 = vmatprep.subr.mxu0 0.0
    %721 = vmatpush1.xpose.msra.mxu0 0.0
    %722 = vmatprep.subr.mxu0 0.0
    %723 = vmatpush1.xpose.msra.mxu0 0.0
    %724 = vmatprep.subr.mxu0 0.0
    %725 = vmatpush1.xpose.msra.mxu0 0.0
    %726 = vmatprep.subr.mxu0 0.0
    %727 = vmatpush1.xpose.msra.mxu0 0.0
    %728 = vmatprep.subr.mxu0 0.0
    %729 = vmatpush1.xpose.msra.mxu0 0.0
    %730 = vmatprep.subr.mxu0 0.0
    %731 = vmatpush1.xpose.msra.mxu0 0.0
    %732 = vmatprep.subr.mxu0 0.0
    %733 = vmatpush1.xpose.msra.mxu0 0.0
    %734 = vmatprep.subr.mxu0 0.0
    %735 = vmatpush1.xpose.msra.mxu0 0.0
    %736 = vmatprep.subr.mxu0 0.0
    %737 = vmatpush1.xpose.msra.mxu0 0.0
    %738 = vmatprep.subr.mxu0 0.0
    %739 = vmatpush1.xpose.msra.mxu0 0.0
    %740 = vmatprep.subr.mxu0 0.0
    %741 = vmatpush1.xpose.msra.mxu0 0.0
    %742 = vmatprep.subr.mxu0 0.0
    %743 = vmatpush1.xpose.msra.mxu0 0.0
    %744 = vmatprep.subr.mxu0 0.0
    %745 = vmatpush1.xpose.msra.mxu0 0.0
    %746 = vmatprep.subr.mxu0 0.0
    %747 = vmatpush1.xpose.msra.mxu0 0.0
    %748 = vmatprep.subr.mxu0 0.0
    %749 = vmatpush1.xpose.msra.mxu0 0.0
    %750 = vmatprep.subr.mxu0 0.0
    %751 = vmatpush1.xpose.msra.mxu0 0.0
    %752 = vmatprep.subr.mxu0 0.0
    %753 = vmatpush1.xpose.msra.mxu0 0.0
    %754 = vmatprep.subr.mxu0 0.0
    %755 = vmatpush1.xpose.msra.mxu0 0.0
    %756 = vmatprep.subr.mxu0 0.0
    %757 = vmatpush1.xpose.msra.mxu0 0.0
    %758 = vmatprep.subr.mxu0 0.0
    %759 = vmatpush1.xpose.msra.mxu0 0.0
    %760 = vmatprep.mubr.f32.mxu0 0.0
    %761 = vmatmul.mubr.f32.gmra.mrb[0].mxu0 %v534
    %v762 = vpop.f32.mrb[0].mxu0
    %v763 = vadd.f32 0.0, %v762
    %v764 = vpop.f32.mrb[0].mxu0
    %765 = vdwg.mxu0
    %766 = vmatprep.subr.mxu0 0.0
    %767 = vmatpush1.xpose.msra.mxu0 %v543
    %768 = vmatprep.subr.mxu0 0.0
    %769 = vmatpush1.xpose.msra.mxu0 0.0
    %770 = vmatprep.subr.mxu0 0.0
    %771 = vmatpush1.xpose.msra.mxu0 0.0
    %772 = vmatprep.subr.mxu0 0.0
    %773 = vmatpush1.xpose.msra.mxu0 0.0
    %774 = vmatprep.subr.mxu0 0.0
    %775 = vmatpush1.xpose.msra.mxu0 0.0
    %776 = vmatprep.subr.mxu0 0.0
    %777 = vmatpush1.xpose.msra.mxu0 0.0
    %778 = vmatprep.subr.mxu0 0.0
    %779 = vmatpush1.xpose.msra.mxu0 0.0
    %780 = vmatprep.subr.mxu0 0.0
    %781 = vmatpush1.xpose.msra.mxu0 0.0
    %782 = vmatprep.subr.mxu0 0.0
    %783 = vmatpush1.xpose.msra.mxu0 0.0
    %784 = vmatprep.subr.mxu0 0.0
    %785 = vmatpush1.xpose.msra.mxu0 0.0
    %786 = vmatprep.subr.mxu0 0.0
    %787 = vmatpush1.xpose.msra.mxu0 0.0
    %788 = vmatprep.subr.mxu0 0.0
    %789 = vmatpush1.xpose.msra.mxu0 0.0
    %790 = vmatprep.subr.mxu0 0.0
    %791 = vmatpush1.xpose.msra.mxu0 0.0
    %792 = vmatprep.subr.mxu0 0.0
    %793 = vmatpush1.xpose.msra.mxu0 0.0
    %794 = vmatprep.subr.mxu0 0.0
    %795 = vmatpush1.xpose.msra.mxu0 0.0
    %796 = vmatprep.subr.mxu0 0.0
    %797 = vmatpush1.xpose.msra.mxu0 0.0
    %798 = vmatprep.subr.mxu0 0.0
    %799 = vmatpush1.xpose.msra.mxu0 0.0
    %800 = vmatprep.subr.mxu0 0.0
    %801 = vmatpush1.xpose.msra.mxu0 0.0
    %802 = vmatprep.subr.mxu0 0.0
    %803 = vmatpush1.xpose.msra.mxu0 0.0
    %804 = vmatprep.subr.mxu0 0.0
    %805 = vmatpush1.xpose.msra.mxu0 0.0
    %806 = vmatprep.subr.mxu0 0.0
    %807 = vmatpush1.xpose.msra.mxu0 0.0
    %808 = vmatprep.subr.mxu0 0.0
    %809 = vmatpush1.xpose.msra.mxu0 0.0
    %810 = vmatprep.subr.mxu0 0.0
    %811 = vmatpush1.xpose.msra.mxu0 0.0
    %812 = vmatprep.subr.mxu0 0.0
    %813 = vmatpush1.xpose.msra.mxu0 0.0
    %814 = vmatprep.subr.mxu0 0.0
    %815 = vmatpush1.xpose.msra.mxu0 0.0
    %816 = vmatprep.subr.mxu0 0.0
    %817 = vmatpush1.xpose.msra.mxu0 0.0
    %818 = vmatprep.subr.mxu0 0.0
    %819 = vmatpush1.xpose.msra.mxu0 0.0
    %820 = vmatprep.subr.mxu0 0.0
    %821 = vmatpush1.xpose.msra.mxu0 0.0
    %822 = vmatprep.subr.mxu0 0.0
    %823 = vmatpush1.xpose.msra.mxu0 0.0
    %824 = vmatprep.subr.mxu0 0.0
    %825 = vmatpush1.xpose.msra.mxu0 0.0
    %826 = vmatprep.subr.mxu0 0.0
    %827 = vmatpush1.xpose.msra.mxu0 0.0
    %828 = vmatprep.subr.mxu0 0.0
    %829 = vmatpush1.xpose.msra.mxu0 0.0
    %830 = vmatprep.mubr.f32.mxu0 0.0
    %831 = vmatmul.mubr.f32.gmra.mrb[0].mxu0 %v535
    %v832 = vpop.f32.mrb[0].mxu0
    %v833 = vadd.f32 0.0, %v832
    %v834 = vpop.f32.mrb[0].mxu0
    %835 = vdwg.mxu0
    %836 = vmatprep.subr.mxu0 0.0
    %837 = vmatpush1.xpose.msra.mxu0 %v544
    %838 = vmatprep.subr.mxu0 0.0
    %839 = vmatpush1.xpose.msra.mxu0 0.0
    %840 = vmatprep.subr.mxu0 0.0
    %841 = vmatpush1.xpose.msra.mxu0 0.0
    %842 = vmatprep.subr.mxu0 0.0
    %843 = vmatpush1.xpose.msra.mxu0 0.0
    %844 = vmatprep.subr.mxu0 0.0
    %845 = vmatpush1.xpose.msra.mxu0 0.0
    %846 = vmatprep.subr.mxu0 0.0
    %847 = vmatpush1.xpose.msra.mxu0 0.0
    %848 = vmatprep.subr.mxu0 0.0
    %849 = vmatpush1.xpose.msra.mxu0 0.0
    %850 = vmatprep.subr.mxu0 0.0
    %851 = vmatpush1.xpose.msra.mxu0 0.0
    %852 = vmatprep.subr.mxu0 0.0
    %853 = vmatpush1.xpose.msra.mxu0 0.0
    %854 = vmatprep.subr.mxu0 0.0
    %855 = vmatpush1.xpose.msra.mxu0 0.0
    %856 = vmatprep.subr.mxu0 0.0
    %857 = vmatpush1.xpose.msra.mxu0 0.0
    %858 = vmatprep.subr.mxu0 0.0
    %859 = vmatpush1.xpose.msra.mxu0 0.0
    %860 = vmatprep.subr.mxu0 0.0
    %861 = vmatpush1.xpose.msra.mxu0 0.0
    %862 = vmatprep.subr.mxu0 0.0
    %863 = vmatpush1.xpose.msra.mxu0 0.0
    %864 = vmatprep.subr.mxu0 0.0
    %865 = vmatpush1.xpose.msra.mxu0 0.0
    %866 = vmatprep.subr.mxu0 0.0
    %867 = vmatpush1.xpose.msra.mxu0 0.0
    %868 = vmatprep.subr.mxu0 0.0
    %869 = vmatpush1.xpose.msra.mxu0 0.0
    %870 = vmatprep.subr.mxu0 0.0
    %871 = vmatpush1.xpose.msra.mxu0 0.0
    %872 = vmatprep.subr.mxu0 0.0
    %873 = vmatpush1.xpose.msra.mxu0 0.0
    %874 = vmatprep.subr.mxu0 0.0
    %875 = vmatpush1.xpose.msra.mxu0 0.0
    %876 = vmatprep.subr.mxu0 0.0
    %877 = vmatpush1.xpose.msra.mxu0 0.0
    %878 = vmatprep.subr.mxu0 0.0
    %879 = vmatpush1.xpose.msra.mxu0 0.0
    %880 = vmatprep.subr.mxu0 0.0
    %881 = vmatpush1.xpose.msra.mxu0 0.0
    %882 = vmatprep.subr.mxu0 0.0
    %883 = vmatpush1.xpose.msra.mxu0 0.0
    %884 = vmatprep.subr.mxu0 0.0
    %885 = vmatpush1.xpose.msra.mxu0 0.0
    %886 = vmatprep.subr.mxu0 0.0
    %887 = vmatpush1.xpose.msra.mxu0 0.0
    %888 = vmatprep.subr.mxu0 0.0
    %889 = vmatpush1.xpose.msra.mxu0 0.0
    %890 = vmatprep.subr.mxu0 0.0
    %891 = vmatpush1.xpose.msra.mxu0 0.0
    %892 = vmatprep.subr.mxu0 0.0
    %893 = vmatpush1.xpose.msra.mxu0 0.0
    %894 = vmatprep.subr.mxu0 0.0
    %895 = vmatpush1.xpose.msra.mxu0 0.0
    %896 = vmatprep.subr.mxu0 0.0
    %897 = vmatpush1.xpose.msra.mxu0 0.0
    %898 = vmatprep.subr.mxu0 0.0
    %899 = vmatpush1.xpose.msra.mxu0 0.0
    %900 = vmatprep.mubr.f32.mxu0 0.0
    %901 = vmatmul.mubr.f32.gmra.mrb[0].mxu0 %v536
    %v902 = vpop.f32.mrb[0].mxu0
    %v903 = vadd.f32 0.0, %v902
    %v904 = vpop.f32.mrb[0].mxu0
    %905 = vdwg.mxu0
    %906 = vmatprep.subr.mxu0 0.0
    %907 = vmatpush1.xpose.msra.mxu0 %v545
    %908 = vmatprep.subr.mxu0 0.0
    %909 = vmatpush1.xpose.msra.mxu0 0.0
    %910 = vmatprep.subr.mxu0 0.0
    %911 = vmatpush1.xpose.msra.mxu0 0.0
    %912 = vmatprep.subr.mxu0 0.0
    %913 = vmatpush1.xpose.msra.mxu0 0.0
    %914 = vmatprep.subr.mxu0 0.0
    %915 = vmatpush1.xpose.msra.mxu0 0.0
    %916 = vmatprep.subr.mxu0 0.0
    %917 = vmatpush1.xpose.msra.mxu0 0.0
    %918 = vmatprep.subr.mxu0 0.0
    %919 = vmatpush1.xpose.msra.mxu0 0.0
    %920 = vmatprep.subr.mxu0 0.0
    %921 = vmatpush1.xpose.msra.mxu0 0.0
    %922 = vmatprep.subr.mxu0 0.0
    %923 = vmatpush1.xpose.msra.mxu0 0.0
    %924 = vmatprep.subr.mxu0 0.0
    %925 = vmatpush1.xpose.msra.mxu0 0.0
    %926 = vmatprep.subr.mxu0 0.0
    %927 = vmatpush1.xpose.msra.mxu0 0.0
    %928 = vmatprep.subr.mxu0 0.0
    %929 = vmatpush1.xpose.msra.mxu0 0.0
    %930 = vmatprep.subr.mxu0 0.0
    %931 = vmatpush1.xpose.msra.mxu0 0.0
    %932 = vmatprep.subr.mxu0 0.0
    %933 = vmatpush1.xpose.msra.mxu0 0.0
    %934 = vmatprep.subr.mxu0 0.0
    %935 = vmatpush1.xpose.msra.mxu0 0.0
    %936 = vmatprep.subr.mxu0 0.0
    %937 = vmatpush1.xpose.msra.mxu0 0.0
    %938 = vmatprep.subr.mxu0 0.0
    %939 = vmatpush1.xpose.msra.mxu0 0.0
    %940 = vmatprep.subr.mxu0 0.0
    %941 = vmatpush1.xpose.msra.mxu0 0.0
    %942 = vmatprep.subr.mxu0 0.0
    %943 = vmatpush1.xpose.msra.mxu0 0.0
    %944 = vmatprep.subr.mxu0 0.0
    %945 = vmatpush1.xpose.msra.mxu0 0.0
    %946 = vmatprep.subr.mxu0 0.0
    %947 = vmatpush1.xpose.msra.mxu0 0.0
    %948 = vmatprep.subr.mxu0 0.0
    %949 = vmatpush1.xpose.msra.mxu0 0.0
    %950 = vmatprep.subr.mxu0 0.0
    %951 = vmatpush1.xpose.msra.mxu0 0.0
    %952 = vmatprep.subr.mxu0 0.0
    %953 = vmatpush1.xpose.msra.mxu0 0.0
    %954 = vmatprep.subr.mxu0 0.0
    %955 = vmatpush1.xpose.msra.mxu0 0.0
    %956 = vmatprep.subr.mxu0 0.0
    %957 = vmatpush1.xpose.msra.mxu0 0.0
    %958 = vmatprep.subr.mxu0 0.0
    %959 = vmatpush1.xpose.msra.mxu0 0.0
    %960 = vmatprep.subr.mxu0 0.0
    %961 = vmatpush1.xpose.msra.mxu0 0.0
    %962 = vmatprep.subr.mxu0 0.0
    %963 = vmatpush1.xpose.msra.mxu0 0.0
    %964 = vmatprep.subr.mxu0 0.0
    %965 = vmatpush1.xpose.msra.mxu0 0.0
    %966 = vmatprep.subr.mxu0 0.0
    %967 = vmatpush1.xpose.msra.mxu0 0.0
    %968 = vmatprep.subr.mxu0 0.0
    %969 = vmatpush1.xpose.msra.mxu0 0.0
    %970 = vmatprep.mubr.f32.mxu0 0.0
    %971 = vmatmul.mubr.f32.gmra.mrb[0].mxu0 %v537
    %v972 = vpop.f32.mrb[0].mxu0
    %v973 = vadd.f32 0.0, %v972
    %v974 = vpop.f32.mrb[0].mxu0
    %975 = vdwg.mxu0
    %976 = vmatprep.subr.mxu0 0.0
    %977 = vmatpush1.xpose.msra.mxu0 %v546
    %978 = vmatprep.subr.mxu0 0.0
    %979 = vmatpush1.xpose.msra.mxu0 0.0
    %980 = vmatprep.subr.mxu0 0.0
    %981 = vmatpush1.xpose.msra.mxu0 0.0
    %982 = vmatprep.subr.mxu0 0.0
    %983 = vmatpush1.xpose.msra.mxu0 0.0
    %984 = vmatprep.subr.mxu0 0.0
    %985 = vmatpush1.xpose.msra.mxu0 0.0
    %986 = vmatprep.subr.mxu0 0.0
    %987 = vmatpush1.xpose.msra.mxu0 0.0
    %988 = vmatprep.subr.mxu0 0.0
    %989 = vmatpush1.xpose.msra.mxu0 0.0
    %990 = vmatprep.subr.mxu0 0.0
    %991 = vmatpush1.xpose.msra.mxu0 0.0
    %992 = vmatprep.subr.mxu0 0.0
    %993 = vmatpush1.xpose.msra.mxu0 0.0
    %994 = vmatprep.subr.mxu0 0.0
    %995 = vmatpush1.xpose.msra.mxu0 0.0
    %996 = vmatprep.subr.mxu0 0.0
    %997 = vmatpush1.xpose.msra.mxu0 0.0
    %998 = vmatprep.subr.mxu0 0.0
    %999 = vmatpush1.xpose.msra.mxu0 0.0
    %1000 = vmatprep.subr.mxu0 0.0
    %1001 = vmatpush1.xpose.msra.mxu0 0.0
    %1002 = vmatprep.subr.mxu0 0.0
    %1003 = vmatpush1.xpose.msra.mxu0 0.0
    %1004 = vmatprep.subr.mxu0 0.0
    %1005 = vmatpush1.xpose.msra.mxu0 0.0
    %1006 = vmatprep.subr.mxu0 0.0
    %1007 = vmatpush1.xpose.msra.mxu0 0.0
    %1008 = vmatprep.subr.mxu0 0.0
    %1009 = vmatpush1.xpose.msra.mxu0 0.0
    %1010 = vmatprep.subr.mxu0 0.0
    %1011 = vmatpush1.xpose.msra.mxu0 0.0
    %1012 = vmatprep.subr.mxu0 0.0
    %1013 = vmatpush1.xpose.msra.mxu0 0.0
    %1014 = vmatprep.subr.mxu0 0.0
    %1015 = vmatpush1.xpose.msra.mxu0 0.0
    %1016 = vmatprep.subr.mxu0 0.0
    %1017 = vmatpush1.xpose.msra.mxu0 0.0
    %1018 = vmatprep.subr.mxu0 0.0
    %1019 = vmatpush1.xpose.msra.mxu0 0.0
    %1020 = vmatprep.subr.mxu0 0.0
    %1021 = vmatpush1.xpose.msra.mxu0 0.0
    %1022 = vmatprep.subr.mxu0 0.0
    %1023 = vmatpush1.xpose.msra.mxu0 0.0
    %1024 = vmatprep.subr.mxu0 0.0
    %1025 = vmatpush1.xpose.msra.mxu0 0.0
    %1026 = vmatprep.subr.mxu0 0.0
    %1027 = vmatpush1.xpose.msra.mxu0 0.0
    %1028 = vmatprep.subr.mxu0 0.0
    %1029 = vmatpush1.xpose.msra.mxu0 0.0
    %1030 = vmatprep.subr.mxu0 0.0
    %1031 = vmatpush1.xpose.msra.mxu0 0.0
    %1032 = vmatprep.subr.mxu0 0.0
    %1033 = vmatpush1.xpose.msra.mxu0 0.0
    %1034 = vmatprep.subr.mxu0 0.0
    %1035 = vmatpush1.xpose.msra.mxu0 0.0
    %1036 = vmatprep.subr.mxu0 0.0
    %1037 = vmatpush1.xpose.msra.mxu0 0.0
    %1038 = vmatprep.subr.mxu0 0.0
    %1039 = vmatpush1.xpose.msra.mxu0 0.0
    %1040 = vmatprep.mubr.f32.mxu0 0.0
    %1041 = vmatmul.mubr.f32.gmra.mrb[0].mxu0 %v538
    %v1042 = vpop.f32.mrb[0].mxu0
    %v1043 = vadd.f32 0.0, %v1042
    %v1044 = vpop.f32.mrb[0].mxu0
    %1045 = vdwg.mxu0
    %1046 = vmatprep.subr.mxu0 0.0
    %1047 = vmatpush1.xpose.msra.mxu0 %v547
    %1048 = vmatprep.subr.mxu0 0.0
    %1049 = vmatpush1.xpose.msra.mxu0 0.0
    %1050 = vmatprep.subr.mxu0 0.0
    %1051 = vmatpush1.xpose.msra.mxu0 0.0
    %1052 = vmatprep.subr.mxu0 0.0
    %1053 = vmatpush1.xpose.msra.mxu0 0.0
    %1054 = vmatprep.subr.mxu0 0.0
    %1055 = vmatpush1.xpose.msra.mxu0 0.0
    %1056 = vmatprep.subr.mxu0 0.0
    %1057 = vmatpush1.xpose.msra.mxu0 0.0
    %1058 = vmatprep.subr.mxu0 0.0
    %1059 = vmatpush1.xpose.msra.mxu0 0.0
    %1060 = vmatprep.subr.mxu0 0.0
    %1061 = vmatpush1.xpose.msra.mxu0 0.0
    %1062 = vmatprep.subr.mxu0 0.0
    %1063 = vmatpush1.xpose.msra.mxu0 0.0
    %1064 = vmatprep.subr.mxu0 0.0
    %1065 = vmatpush1.xpose.msra.mxu0 0.0
    %1066 = vmatprep.subr.mxu0 0.0
    %1067 = vmatpush1.xpose.msra.mxu0 0.0
    %1068 = vmatprep.subr.mxu0 0.0
    %1069 = vmatpush1.xpose.msra.mxu0 0.0
    %1070 = vmatprep.subr.mxu0 0.0
    %1071 = vmatpush1.xpose.msra.mxu0 0.0
    %1072 = vmatprep.subr.mxu0 0.0
    %1073 = vmatpush1.xpose.msra.mxu0 0.0
    %1074 = vmatprep.subr.mxu0 0.0
    %1075 = vmatpush1.xpose.msra.mxu0 0.0
    %1076 = vmatprep.subr.mxu0 0.0
    %1077 = vmatpush1.xpose.msra.mxu0 0.0
    %1078 = vmatprep.subr.mxu0 0.0
    %1079 = vmatpush1.xpose.msra.mxu0 0.0
    %1080 = vmatprep.subr.mxu0 0.0
    %1081 = vmatpush1.xpose.msra.mxu0 0.0
    %1082 = vmatprep.subr.mxu0 0.0
    %1083 = vmatpush1.xpose.msra.mxu0 0.0
    %1084 = vmatprep.subr.mxu0 0.0
    %1085 = vmatpush1.xpose.msra.mxu0 0.0
    %1086 = vmatprep.subr.mxu0 0.0
    %1087 = vmatpush1.xpose.msra.mxu0 0.0
    %1088 = vmatprep.subr.mxu0 0.0
    %1089 = vmatpush1.xpose.msra.mxu0 0.0
    %1090 = vmatprep.subr.mxu0 0.0
    %1091 = vmatpush1.xpose.msra.mxu0 0.0
    %1092 = vmatprep.subr.mxu0 0.0
    %1093 = vmatpush1.xpose.msra.mxu0 0.0
    %1094 = vmatprep.subr.mxu0 0.0
    %1095 = vmatpush1.xpose.msra.mxu0 0.0
    %1096 = vmatprep.subr.mxu0 0.0
    %1097 = vmatpush1.xpose.msra.mxu0 0.0
    %1098 = vmatprep.subr.mxu0 0.0
    %1099 = vmatpush1.xpose.msra.mxu0 0.0
    %1100 = vmatprep.subr.mxu0 0.0
    %1101 = vmatpush1.xpose.msra.mxu0 0.0
    %1102 = vmatprep.subr.mxu0 0.0
    %1103 = vmatpush1.xpose.msra.mxu0 0.0
    %1104 = vmatprep.subr.mxu0 0.0
    %1105 = vmatpush1.xpose.msra.mxu0 0.0
    %1106 = vmatprep.subr.mxu0 0.0
    %1107 = vmatpush1.xpose.msra.mxu0 0.0
    %1108 = vmatprep.subr.mxu0 0.0
    %1109 = vmatpush1.xpose.msra.mxu0 0.0
    %1110 = vmatprep.mubr.f32.mxu0 0.0
    %1111 = vmatmul.mubr.f32.gmra.mrb[0].mxu0 %v539
    %v1112 = vpop.f32.mrb[0].mxu0
    %v1113 = vadd.f32 0.0, %v1112
    %v1114 = vpop.f32.mrb[0].mxu0
    %1115 = vdwg.mxu0
    %v1116 = vmul.f32 %v623, 0.35355338
    %v1117 = vmul.f32 %v693, 0.35355338
    %v1118 = vmul.f32 %v763, 0.35355338
    %v1119 = vmul.f32 %v833, 0.35355338
    %v1120 = vmul.f32 %v903, 0.35355338
    %v1121 = vmul.f32 %v973, 0.35355338
    %v1122 = vmul.f32 %v1043, 0.35355338
    %v1123 = vmul.f32 %v1113, 0.35355338
    %vm1124 = vcmask 64512
    %v1125 = vsel %vm1124, %v1116, -inf
    %1126 = vmax.xlane.f32.xlu0 %v1125
    %v1127 = vpop.xlane.xlu0 %1126
    %v1128 = vsel %vm1124, %v1117, -inf
    %1129 = vmax.xlane.f32.xlu0 %v1128
    %v1130 = vpop.xlane.xlu0 %1129
    %v1131 = vsel %vm1124, %v1118, -inf
    %1132 = vmax.xlane.f32.xlu0 %v1131
    %v1133 = vpop.xlane.xlu0 %1132
    %v1134 = vsel %vm1124, %v1119, -inf
    %1135 = vmax.xlane.f32.xlu0 %v1134
    %v1136 = vpop.xlane.xlu0 %1135
    %v1137 = vsel %vm1124, %v1120, -inf
    %1138 = vmax.xlane.f32.xlu0 %v1137
    %v1139 = vpop.xlane.xlu0 %1138
    %v1140 = vsel %vm1124, %v1121, -inf
    %1141 = vmax.xlane.f32.xlu0 %v1140
    %v1142 = vpop.xlane.xlu0 %1141
    %v1143 = vsel %vm1124, %v1122, -inf
    %1144 = vmax.xlane.f32.xlu0 %v1143
    %v1145 = vpop.xlane.xlu0 %1144
    %v1146 = vsel %vm1124, %v1123, -inf
    %1147 = vmax.xlane.f32.xlu0 %v1146
    %v1148 = vpop.xlane.xlu0 %1147
    %v1149 = vsub.f32 %v1116, %v1127
    %v1150 = vsub.f32 %v1117, %v1130
    %v1151 = vsub.f32 %v1118, %v1133
    %v1152 = vsub.f32 %v1119, %v1136
    %v1153 = vsub.f32 %v1120, %v1139
    %v1154 = vsub.f32 %v1121, %v1142
    %v1155 = vsub.f32 %v1122, %v1145
    %v1156 = vsub.f32 %v1123, %v1148
    %v1157 = vmul.f32 %v1149, 1.442695
    %v1158 = vpow.pop %v1157
    %v1159 = vmul.f32 %v1150, 1.442695
    %v1160 = vpow.pop %v1159
    %v1161 = vmul.f32 %v1151, 1.442695
    %v1162 = vpow.pop %v1161
    %v1163 = vmul.f32 %v1152, 1.442695
    %v1164 = vpow.pop %v1163
    %v1165 = vmul.f32 %v1153, 1.442695
    %v1166 = vpow.pop %v1165
    %v1167 = vmul.f32 %v1154, 1.442695
    %v1168 = vpow.pop %v1167
    %v1169 = vmul.f32 %v1155, 1.442695
    %v1170 = vpow.pop %v1169
    %v1171 = vmul.f32 %v1156, 1.442695
    %v1172 = vpow.pop %v1171
    %v1173 = vsel %vm1124, %v1158, 0.0
    %1174 = vadd.xlane.f32.xlu0 %v1173
    %v1175 = vpop.xlane.xlu0 %1174
    %v1176 = vsel %vm1124, %v1160, 0.0
    %1177 = vadd.xlane.f32.xlu0 %v1176
    %v1178 = vpop.xlane.xlu0 %1177
    %v1179 = vsel %vm1124, %v1162, 0.0
    %1180 = vadd.xlane.f32.xlu0 %v1179
    %v1181 = vpop.xlane.xlu0 %1180
    %v1182 = vsel %vm1124, %v1164, 0.0
    %1183 = vadd.xlane.f32.xlu0 %v1182
    %v1184 = vpop.xlane.xlu0 %1183
    %v1185 = vsel %vm1124, %v1166, 0.0
    %1186 = vadd.xlane.f32.xlu0 %v1185
    %v1187 = vpop.xlane.xlu0 %1186
    %v1188 = vsel %vm1124, %v1168, 0.0
    %1189 = vadd.xlane.f32.xlu0 %v1188
    %v1190 = vpop.xlane.xlu0 %1189
    %v1191 = vsel %vm1124, %v1170, 0.0
    %1192 = vadd.xlane.f32.xlu0 %v1191
    %v1193 = vpop.xlane.xlu0 %1192
    %v1194 = vsel %vm1124, %v1172, 0.0
    %1195 = vadd.xlane.f32.xlu0 %v1194
    %v1196 = vpop.xlane.xlu0 %1195
    %v1197 = vrcp.pop %v1175
    %v1198 = vrcp.pop %v1178
    %v1199 = vrcp.pop %v1181
    %v1200 = vrcp.pop %v1184
    %v1201 = vrcp.pop %v1187
    %v1202 = vrcp.pop %v1190
    %v1203 = vrcp.pop %v1193
    %v1204 = vrcp.pop %v1196
    %v1205 = vmul.f32 %v1158, %v1197
    %v1206 = vmul.f32 %v1160, %v1198
    %v1207 = vmul.f32 %v1162, %v1199
    %v1208 = vmul.f32 %v1164, %v1200
    %v1209 = vmul.f32 %v1166, %v1201
    %v1210 = vmul.f32 %v1168, %v1202
    %v1211 = vmul.f32 %v1170, %v1203
    %v1212 = vmul.f32 %v1172, %v1204
    %v1214 = vsel %vm1124, %v1205, 0
    %1216 = vmatprep.subr.mxu0 0.0
    %1217 = vmatpush1.msra.mxu0 %v548
    %1218 = vmatprep.subr.mxu0 0.0
    %1219 = vmatpush1.msra.mxu0 0.0
    %1220 = vmatprep.subr.mxu0 0.0
    %1221 = vmatpush1.msra.mxu0 0.0
    %1222 = vmatprep.subr.mxu0 0.0
    %1223 = vmatpush1.msra.mxu0 0.0
    %1224 = vmatprep.subr.mxu0 0.0
    %1225 = vmatpush1.msra.mxu0 0.0
    %1226 = vmatprep.subr.mxu0 0.0
    %1227 = vmatpush1.msra.mxu0 0.0
    %1228 = vmatprep.subr.mxu0 0.0
    %1229 = vmatpush1.msra.mxu0 0.0
    %1230 = vmatprep.subr.mxu0 0.0
    %1231 = vmatpush1.msra.mxu0 0.0
    %1232 = vmatprep.subr.mxu0 0.0
    %1233 = vmatpush1.msra.mxu0 0.0
    %1234 = vmatprep.subr.mxu0 0.0
    %1235 = vmatpush1.msra.mxu0 0.0
    %1236 = vmatprep.subr.mxu0 0.0
    %1237 = vmatpush1.msra.mxu0 0.0
    %1238 = vmatprep.subr.mxu0 0.0
    %1239 = vmatpush1.msra.mxu0 0.0
    %1240 = vmatprep.subr.mxu0 0.0
    %1241 = vmatpush1.msra.mxu0 0.0
    %1242 = vmatprep.subr.mxu0 0.0
    %1243 = vmatpush1.msra.mxu0 0.0
    %1244 = vmatprep.subr.mxu0 0.0
    %1245 = vmatpush1.msra.mxu0 0.0
    %1246 = vmatprep.subr.mxu0 0.0
    %1247 = vmatpush1.msra.mxu0 0.0
    %1248 = vmatprep.subr.mxu0 0.0
    %1249 = vmatpush1.msra.mxu0 0.0
    %1250 = vmatprep.subr.mxu0 0.0
    %1251 = vmatpush1.msra.mxu0 0.0
    %1252 = vmatprep.subr.mxu0 0.0
    %1253 = vmatpush1.msra.mxu0 0.0
    %1254 = vmatprep.subr.mxu0 0.0
    %1255 = vmatpush1.msra.mxu0 0.0
    %1256 = vmatprep.subr.mxu0 0.0
    %1257 = vmatpush1.msra.mxu0 0.0
    %1258 = vmatprep.subr.mxu0 0.0
    %1259 = vmatpush1.msra.mxu0 0.0
    %1260 = vmatprep.subr.mxu0 0.0
    %1261 = vmatpush1.msra.mxu0 0.0
    %1262 = vmatprep.subr.mxu0 0.0
    %1263 = vmatpush1.msra.mxu0 0.0
    %1264 = vmatprep.subr.mxu0 0.0
    %1265 = vmatpush1.msra.mxu0 0.0
    %1266 = vmatprep.subr.mxu0 0.0
    %1267 = vmatpush1.msra.mxu0 0.0
    %1268 = vmatprep.subr.mxu0 0.0
    %1269 = vmatpush1.msra.mxu0 0.0
    %1270 = vmatprep.subr.mxu0 0.0
    %1271 = vmatpush1.msra.mxu0 0.0
    %1272 = vmatprep.subr.mxu0 0.0
    %1273 = vmatpush1.msra.mxu0 0.0
    %1274 = vmatprep.subr.mxu0 0.0
    %1275 = vmatpush1.msra.mxu0 0.0
    %1276 = vmatprep.subr.mxu0 0.0
    %1277 = vmatpush1.msra.mxu0 0.0
    %1278 = vmatprep.subr.mxu0 0.0
    %1279 = vmatpush1.msra.mxu0 0.0
    %1280 = vmatprep.mubr.f32.mxu0 0.0
    %1281 = vmatmul.mubr.f32.gmra.mrb[0].mxu0 %v1214
    %v1282 = vpop.f32.mrb[0].mxu0
    %v1283 = vadd.f32 0.0, %v1282
    %v1284 = vpop.f32.mrb[0].mxu0
    %1285 = vdwg.mxu0
    %v1287 = vsel %vm1124, %v1206, 0
    %1289 = vmatprep.subr.mxu0 0.0
    %1290 = vmatpush1.msra.mxu0 %v549
    %1291 = vmatprep.subr.mxu0 0.0
    %1292 = vmatpush1.msra.mxu0 0.0
    %1293 = vmatprep.subr.mxu0 0.0
    %1294 = vmatpush1.msra.mxu0 0.0
    %1295 = vmatprep.subr.mxu0 0.0
    %1296 = vmatpush1.msra.mxu0 0.0
    %1297 = vmatprep.subr.mxu0 0.0
    %1298 = vmatpush1.msra.mxu0 0.0
    %1299 = vmatprep.subr.mxu0 0.0
    %1300 = vmatpush1.msra.mxu0 0.0
    %1301 = vmatprep.subr.mxu0 0.0
    %1302 = vmatpush1.msra.mxu0 0.0
    %1303 = vmatprep.subr.mxu0 0.0
    %1304 = vmatpush1.msra.mxu0 0.0
    %1305 = vmatprep.subr.mxu0 0.0
    %1306 = vmatpush1.msra.mxu0 0.0
    %1307 = vmatprep.subr.mxu0 0.0
    %1308 = vmatpush1.msra.mxu0 0.0
    %1309 = vmatprep.subr.mxu0 0.0
    %1310 = vmatpush1.msra.mxu0 0.0
    %1311 = vmatprep.subr.mxu0 0.0
    %1312 = vmatpush1.msra.mxu0 0.0
    %1313 = vmatprep.subr.mxu0 0.0
    %1314 = vmatpush1.msra.mxu0 0.0
    %1315 = vmatprep.subr.mxu0 0.0
    %1316 = vmatpush1.msra.mxu0 0.0
    %1317 = vmatprep.subr.mxu0 0.0
    %1318 = vmatpush1.msra.mxu0 0.0
    %1319 = vmatprep.subr.mxu0 0.0
    %1320 = vmatpush1.msra.mxu0 0.0
    %1321 = vmatprep.subr.mxu0 0.0
    %1322 = vmatpush1.msra.mxu0 0.0
    %1323 = vmatprep.subr.mxu0 0.0
    %1324 = vmatpush1.msra.mxu0 0.0
    %1325 = vmatprep.subr.mxu0 0.0
    %1326 = vmatpush1.msra.mxu0 0.0
    %1327 = vmatprep.subr.mxu0 0.0
    %1328 = vmatpush1.msra.mxu0 0.0
    %1329 = vmatprep.subr.mxu0 0.0
    %1330 = vmatpush1.msra.mxu0 0.0
    %1331 = vmatprep.subr.mxu0 0.0
    %1332 = vmatpush1.msra.mxu0 0.0
    %1333 = vmatprep.subr.mxu0 0.0
    %1334 = vmatpush1.msra.mxu0 0.0
    %1335 = vmatprep.subr.mxu0 0.0
    %1336 = vmatpush1.msra.mxu0 0.0
    %1337 = vmatprep.subr.mxu0 0.0
    %1338 = vmatpush1.msra.mxu0 0.0
    %1339 = vmatprep.subr.mxu0 0.0
    %1340 = vmatpush1.msra.mxu0 0.0
    %1341 = vmatprep.subr.mxu0 0.0
    %1342 = vmatpush1.msra.mxu0 0.0
    %1343 = vmatprep.subr.mxu0 0.0
    %1344 = vmatpush1.msra.mxu0 0.0
    %1345 = vmatprep.subr.mxu0 0.0
    %1346 = vmatpush1.msra.mxu0 0.0
    %1347 = vmatprep.subr.mxu0 0.0
    %1348 = vmatpush1.msra.mxu0 0.0
    %1349 = vmatprep.subr.mxu0 0.0
    %1350 = vmatpush1.msra.mxu0 0.0
    %1351 = vmatprep.subr.mxu0 0.0
    %1352 = vmatpush1.msra.mxu0 0.0
    %1353 = vmatprep.mubr.f32.mxu0 0.0
    %1354 = vmatmul.mubr.f32.gmra.mrb[0].mxu0 %v1287
    %v1355 = vpop.f32.mrb[0].mxu0
    %v1356 = vadd.f32 0.0, %v1355
    %v1357 = vpop.f32.mrb[0].mxu0
    %1358 = vdwg.mxu0
    %v1360 = vsel %vm1124, %v1207, 0
    %1362 = vmatprep.subr.mxu0 0.0
    %1363 = vmatpush1.msra.mxu0 %v550
    %1364 = vmatprep.subr.mxu0 0.0
    %1365 = vmatpush1.msra.mxu0 0.0
    %1366 = vmatprep.subr.mxu0 0.0
    %1367 = vmatpush1.msra.mxu0 0.0
    %1368 = vmatprep.subr.mxu0 0.0
    %1369 = vmatpush1.msra.mxu0 0.0
    %1370 = vmatprep.subr.mxu0 0.0
    %1371 = vmatpush1.msra.mxu0 0.0
    %1372 = vmatprep.subr.mxu0 0.0
    %1373 = vmatpush1.msra.mxu0 0.0
    %1374 = vmatprep.subr.mxu0 0.0
    %1375 = vmatpush1.msra.mxu0 0.0
    %1376 = vmatprep.subr.mxu0 0.0
    %1377 = vmatpush1.msra.mxu0 0.0
    %1378 = vmatprep.subr.mxu0 0.0
    %1379 = vmatpush1.msra.mxu0 0.0
    %1380 = vmatprep.subr.mxu0 0.0
    %1381 = vmatpush1.msra.mxu0 0.0
    %1382 = vmatprep.subr.mxu0 0.0
    %1383 = vmatpush1.msra.mxu0 0.0
    %1384 = vmatprep.subr.mxu0 0.0
    %1385 = vmatpush1.msra.mxu0 0.0
    %1386 = vmatprep.subr.mxu0 0.0
    %1387 = vmatpush1.msra.mxu0 0.0
    %1388 = vmatprep.subr.mxu0 0.0
    %1389 = vmatpush1.msra.mxu0 0.0
    %1390 = vmatprep.subr.mxu0 0.0
    %1391 = vmatpush1.msra.mxu0 0.0
    %1392 = vmatprep.subr.mxu0 0.0
    %1393 = vmatpush1.msra.mxu0 0.0
    %1394 = vmatprep.subr.mxu0 0.0
    %1395 = vmatpush1.msra.mxu0 0.0
    %1396 = vmatprep.subr.mxu0 0.0
    %1397 = vmatpush1.msra.mxu0 0.0
    %1398 = vmatprep.subr.mxu0 0.0
    %1399 = vmatpush1.msra.mxu0 0.0
    %1400 = vmatprep.subr.mxu0 0.0
    %1401 = vmatpush1.msra.mxu0 0.0
    %1402 = vmatprep.subr.mxu0 0.0
    %1403 = vmatpush1.msra.mxu0 0.0
    %1404 = vmatprep.subr.mxu0 0.0
    %1405 = vmatpush1.msra.mxu0 0.0
    %1406 = vmatprep.subr.mxu0 0.0
    %1407 = vmatpush1.msra.mxu0 0.0
    %1408 = vmatprep.subr.mxu0 0.0
    %1409 = vmatpush1.msra.mxu0 0.0
    %1410 = vmatprep.subr.mxu0 0.0
    %1411 = vmatpush1.msra.mxu0 0.0
    %1412 = vmatprep.subr.mxu0 0.0
    %1413 = vmatpush1.msra.mxu0 0.0
    %1414 = vmatprep.subr.mxu0 0.0
    %1415 = vmatpush1.msra.mxu0 0.0
    %1416 = vmatprep.subr.mxu0 0.0
    %1417 = vmatpush1.msra.mxu0 0.0
    %1418 = vmatprep.subr.mxu0 0.0
    %1419 = vmatpush1.msra.mxu0 0.0
    %1420 = vmatprep.subr.mxu0 0.0
    %1421 = vmatpush1.msra.mxu0 0.0
    %1422 = vmatprep.subr.mxu0 0.0
    %1423 = vmatpush1.msra.mxu0 0.0
    %1424 = vmatprep.subr.mxu0 0.0
    %1425 = vmatpush1.msra.mxu0 0.0
    %1426 = vmatprep.mubr.f32.mxu0 0.0
    %1427 = vmatmul.mubr.f32.gmra.mrb[0].mxu0 %v1360
    %v1428 = vpop.f32.mrb[0].mxu0
    %v1429 = vadd.f32 0.0, %v1428
    %v1430 = vpop.f32.mrb[0].mxu0
    %1431 = vdwg.mxu0
    %v1433 = vsel %vm1124, %v1208, 0
    %1435 = vmatprep.subr.mxu0 0.0
    %1436 = vmatpush1.msra.mxu0 %v551
    %1437 = vmatprep.subr.mxu0 0.0
    %1438 = vmatpush1.msra.mxu0 0.0
    %1439 = vmatprep.subr.mxu0 0.0
    %1440 = vmatpush1.msra.mxu0 0.0
    %1441 = vmatprep.subr.mxu0 0.0
    %1442 = vmatpush1.msra.mxu0 0.0
    %1443 = vmatprep.subr.mxu0 0.0
    %1444 = vmatpush1.msra.mxu0 0.0
    %1445 = vmatprep.subr.mxu0 0.0
    %1446 = vmatpush1.msra.mxu0 0.0
    %1447 = vmatprep.subr.mxu0 0.0
    %1448 = vmatpush1.msra.mxu0 0.0
    %1449 = vmatprep.subr.mxu0 0.0
    %1450 = vmatpush1.msra.mxu0 0.0
    %1451 = vmatprep.subr.mxu0 0.0
    %1452 = vmatpush1.msra.mxu0 0.0
    %1453 = vmatprep.subr.mxu0 0.0
    %1454 = vmatpush1.msra.mxu0 0.0
    %1455 = vmatprep.subr.mxu0 0.0
    %1456 = vmatpush1.msra.mxu0 0.0
    %1457 = vmatprep.subr.mxu0 0.0
    %1458 = vmatpush1.msra.mxu0 0.0
    %1459 = vmatprep.subr.mxu0 0.0
    %1460 = vmatpush1.msra.mxu0 0.0
    %1461 = vmatprep.subr.mxu0 0.0
    %1462 = vmatpush1.msra.mxu0 0.0
    %1463 = vmatprep.subr.mxu0 0.0
    %1464 = vmatpush1.msra.mxu0 0.0
    %1465 = vmatprep.subr.mxu0 0.0
    %1466 = vmatpush1.msra.mxu0 0.0
    %1467 = vmatprep.subr.mxu0 0.0
    %1468 = vmatpush1.msra.mxu0 0.0
    %1469 = vmatprep.subr.mxu0 0.0
    %1470 = vmatpush1.msra.mxu0 0.0
    %1471 = vmatprep.subr.mxu0 0.0
    %1472 = vmatpush1.msra.mxu0 0.0
    %1473 = vmatprep.subr.mxu0 0.0
    %1474 = vmatpush1.msra.mxu0 0.0
    %1475 = vmatprep.subr.mxu0 0.0
    %1476 = vmatpush1.msra.mxu0 0.0
    %1477 = vmatprep.subr.mxu0 0.0
    %1478 = vmatpush1.msra.mxu0 0.0
    %1479 = vmatprep.subr.mxu0 0.0
    %1480 = vmatpush1.msra.mxu0 0.0
    %1481 = vmatprep.subr.mxu0 0.0
    %1482 = vmatpush1.msra.mxu0 0.0
    %1483 = vmatprep.subr.mxu0 0.0
    %1484 = vmatpush1.msra.mxu0 0.0
    %1485 = vmatprep.subr.mxu0 0.0
    %1486 = vmatpush1.msra.mxu0 0.0
    %1487 = vmatprep.subr.mxu0 0.0
    %1488 = vmatpush1.msra.mxu0 0.0
    %1489 = vmatprep.subr.mxu0 0.0
    %1490 = vmatpush1.msra.mxu0 0.0
    %1491 = vmatprep.subr.mxu0 0.0
    %1492 = vmatpush1.msra.mxu0 0.0
    %1493 = vmatprep.subr.mxu0 0.0
    %1494 = vmatpush1.msra.mxu0 0.0
    %1495 = vmatprep.subr.mxu0 0.0
    %1496 = vmatpush1.msra.mxu0 0.0
    %1497 = vmatprep.subr.mxu0 0.0
    %1498 = vmatpush1.msra.mxu0 0.0
    %1499 = vmatprep.mubr.f32.mxu0 0.0
    %1500 = vmatmul.mubr.f32.gmra.mrb[0].mxu0 %v1433
    %v1501 = vpop.f32.mrb[0].mxu0
    %v1502 = vadd.f32 0.0, %v1501
    %v1503 = vpop.f32.mrb[0].mxu0
    %1504 = vdwg.mxu0
    %v1506 = vsel %vm1124, %v1209, 0
    %1508 = vmatprep.subr.mxu0 0.0
    %1509 = vmatpush1.msra.mxu0 %v552
    %1510 = vmatprep.subr.mxu0 0.0
    %1511 = vmatpush1.msra.mxu0 0.0
    %1512 = vmatprep.subr.mxu0 0.0
    %1513 = vmatpush1.msra.mxu0 0.0
    %1514 = vmatprep.subr.mxu0 0.0
    %1515 = vmatpush1.msra.mxu0 0.0
    %1516 = vmatprep.subr.mxu0 0.0
    %1517 = vmatpush1.msra.mxu0 0.0
    %1518 = vmatprep.subr.mxu0 0.0
    %1519 = vmatpush1.msra.mxu0 0.0
    %1520 = vmatprep.subr.mxu0 0.0
    %1521 = vmatpush1.msra.mxu0 0.0
    %1522 = vmatprep.subr.mxu0 0.0
    %1523 = vmatpush1.msra.mxu0 0.0
    %1524 = vmatprep.subr.mxu0 0.0
    %1525 = vmatpush1.msra.mxu0 0.0
    %1526 = vmatprep.subr.mxu0 0.0
    %1527 = vmatpush1.msra.mxu0 0.0
    %1528 = vmatprep.subr.mxu0 0.0
    %1529 = vmatpush1.msra.mxu0 0.0
    %1530 = vmatprep.subr.mxu0 0.0
    %1531 = vmatpush1.msra.mxu0 0.0
    %1532 = vmatprep.subr.mxu0 0.0
    %1533 = vmatpush1.msra.mxu0 0.0
    %1534 = vmatprep.subr.mxu0 0.0
    %1535 = vmatpush1.msra.mxu0 0.0
    %1536 = vmatprep.subr.mxu0 0.0
    %1537 = vmatpush1.msra.mxu0 0.0
    %1538 = vmatprep.subr.mxu0 0.0
    %1539 = vmatpush1.msra.mxu0 0.0
    %1540 = vmatprep.subr.mxu0 0.0
    %1541 = vmatpush1.msra.mxu0 0.0
    %1542 = vmatprep.subr.mxu0 0.0
    %1543 = vmatpush1.msra.mxu0 0.0
    %1544 = vmatprep.subr.mxu0 0.0
    %1545 = vmatpush1.msra.mxu0 0.0
    %1546 = vmatprep.subr.mxu0 0.0
    %1547 = vmatpush1.msra.mxu0 0.0
    %1548 = vmatprep.subr.mxu0 0.0
    %1549 = vmatpush1.msra.mxu0 0.0
    %1550 = vmatprep.subr.mxu0 0.0
    %1551 = vmatpush1.msra.mxu0 0.0
    %1552 = vmatprep.subr.mxu0 0.0
    %1553 = vmatpush1.msra.mxu0 0.0
    %1554 = vmatprep.subr.mxu0 0.0
    %1555 = vmatpush1.msra.mxu0 0.0
    %1556 = vmatprep.subr.mxu0 0.0
    %1557 = vmatpush1.msra.mxu0 0.0
    %1558 = vmatprep.subr.mxu0 0.0
    %1559 = vmatpush1.msra.mxu0 0.0
    %1560 = vmatprep.subr.mxu0 0.0
    %1561 = vmatpush1.msra.mxu0 0.0
    %1562 = vmatprep.subr.mxu0 0.0
    %1563 = vmatpush1.msra.mxu0 0.0
    %1564 = vmatprep.subr.mxu0 0.0
    %1565 = vmatpush1.msra.mxu0 0.0
    %1566 = vmatprep.subr.mxu0 0.0
    %1567 = vmatpush1.msra.mxu0 0.0
    %1568 = vmatprep.subr.mxu0 0.0
    %1569 = vmatpush1.msra.mxu0 0.0
    %1570 = vmatprep.subr.mxu0 0.0
    %1571 = vmatpush1.msra.mxu0 0.0
    %1572 = vmatprep.mubr.f32.mxu0 0.0
    %1573 = vmatmul.mubr.f32.gmra.mrb[0].mxu0 %v1506
    %v1574 = vpop.f32.mrb[0].mxu0
    %v1575 = vadd.f32 0.0, %v1574
    %v1576 = vpop.f32.mrb[0].mxu0
    %1577 = vdwg.mxu0
    %v1579 = vsel %vm1124, %v1210, 0
    %1581 = vmatprep.subr.mxu0 0.0
    %1582 = vmatpush1.msra.mxu0 %v553
    %1583 = vmatprep.subr.mxu0 0.0
    %1584 = vmatpush1.msra.mxu0 0.0
    %1585 = vmatprep.subr.mxu0 0.0
    %1586 = vmatpush1.msra.mxu0 0.0
    %1587 = vmatprep.subr.mxu0 0.0
    %1588 = vmatpush1.msra.mxu0 0.0
    %1589 = vmatprep.subr.mxu0 0.0
    %1590 = vmatpush1.msra.mxu0 0.0
    %1591 = vmatprep.subr.mxu0 0.0
    %1592 = vmatpush1.msra.mxu0 0.0
    %1593 = vmatprep.subr.mxu0 0.0
    %1594 = vmatpush1.msra.mxu0 0.0
    %1595 = vmatprep.subr.mxu0 0.0
    %1596 = vmatpush1.msra.mxu0 0.0
    %1597 = vmatprep.subr.mxu0 0.0
    %1598 = vmatpush1.msra.mxu0 0.0
    %1599 = vmatprep.subr.mxu0 0.0
    %1600 = vmatpush1.msra.mxu0 0.0
    %1601 = vmatprep.subr.mxu0 0.0
    %1602 = vmatpush1.msra.mxu0 0.0
    %1603 = vmatprep.subr.mxu0 0.0
    %1604 = vmatpush1.msra.mxu0 0.0
    %1605 = vmatprep.subr.mxu0 0.0
    %1606 = vmatpush1.msra.mxu0 0.0
    %1607 = vmatprep.subr.mxu0 0.0
    %1608 = vmatpush1.msra.mxu0 0.0
    %1609 = vmatprep.subr.mxu0 0.0
    %1610 = vmatpush1.msra.mxu0 0.0
    %1611 = vmatprep.subr.mxu0 0.0
    %1612 = vmatpush1.msra.mxu0 0.0
    %1613 = vmatprep.subr.mxu0 0.0
    %1614 = vmatpush1.msra.mxu0 0.0
    %1615 = vmatprep.subr.mxu0 0.0
    %1616 = vmatpush1.msra.mxu0 0.0
    %1617 = vmatprep.subr.mxu0 0.0
    %1618 = vmatpush1.msra.mxu0 0.0
    %1619 = vmatprep.subr.mxu0 0.0
    %1620 = vmatpush1.msra.mxu0 0.0
    %1621 = vmatprep.subr.mxu0 0.0
    %1622 = vmatpush1.msra.mxu0 0.0
    %1623 = vmatprep.subr.mxu0 0.0
    %1624 = vmatpush1.msra.mxu0 0.0
    %1625 = vmatprep.subr.mxu0 0.0
    %1626 = vmatpush1.msra.mxu0 0.0
    %1627 = vmatprep.subr.mxu0 0.0
    %1628 = vmatpush1.msra.mxu0 0.0
    %1629 = vmatprep.subr.mxu0 0.0
    %1630 = vmatpush1.msra.mxu0 0.0
    %1631 = vmatprep.subr.mxu0 0.0
    %1632 = vmatpush1.msra.mxu0 0.0
    %1633 = vmatprep.subr.mxu0 0.0
    %1634 = vmatpush1.msra.mxu0 0.0
    %1635 = vmatprep.subr.mxu0 0.0
    %1636 = vmatpush1.msra.mxu0 0.0
    %1637 = vmatprep.subr.mxu0 0.0
    %1638 = vmatpush1.msra.mxu0 0.0
    %1639 = vmatprep.subr.mxu0 0.0
    %1640 = vmatpush1.msra.mxu0 0.0
    %1641 = vmatprep.subr.mxu0 0.0
    %1642 = vmatpush1.msra.mxu0 0.0
    %1643 = vmatprep.subr.mxu0 0.0
    %1644 = vmatpush1.msra.mxu0 0.0
    %1645 = vmatprep.mubr.f32.mxu0 0.0
    %1646 = vmatmul.mubr.f32.gmra.mrb[0].mxu0 %v1579
    %v1647 = vpop.f32.mrb[0].mxu0
    %v1648 = vadd.f32 0.0, %v1647
    %v1649 = vpop.f32.mrb[0].mxu0
    %1650 = vdwg.mxu0
    %v1652 = vsel %vm1124, %v1211, 0
    %1654 = vmatprep.subr.mxu0 0.0
    %1655 = vmatpush1.msra.mxu0 %v554
    %1656 = vmatprep.subr.mxu0 0.0
    %1657 = vmatpush1.msra.mxu0 0.0
    %1658 = vmatprep.subr.mxu0 0.0
    %1659 = vmatpush1.msra.mxu0 0.0
    %1660 = vmatprep.subr.mxu0 0.0
    %1661 = vmatpush1.msra.mxu0 0.0
    %1662 = vmatprep.subr.mxu0 0.0
    %1663 = vmatpush1.msra.mxu0 0.0
    %1664 = vmatprep.subr.mxu0 0.0
    %1665 = vmatpush1.msra.mxu0 0.0
    %1666 = vmatprep.subr.mxu0 0.0
    %1667 = vmatpush1.msra.mxu0 0.0
    %1668 = vmatprep.subr.mxu0 0.0
    %1669 = vmatpush1.msra.mxu0 0.0
    %1670 = vmatprep.subr.mxu0 0.0
    %1671 = vmatpush1.msra.mxu0 0.0
    %1672 = vmatprep.subr.mxu0 0.0
    %1673 = vmatpush1.msra.mxu0 0.0
    %1674 = vmatprep.subr.mxu0 0.0
    %1675 = vmatpush1.msra.mxu0 0.0
    %1676 = vmatprep.subr.mxu0 0.0
    %1677 = vmatpush1.msra.mxu0 0.0
    %1678 = vmatprep.subr.mxu0 0.0
    %1679 = vmatpush1.msra.mxu0 0.0
    %1680 = vmatprep.subr.mxu0 0.0
    %1681 = vmatpush1.msra.mxu0 0.0
    %1682 = vmatprep.subr.mxu0 0.0
    %1683 = vmatpush1.msra.mxu0 0.0
    %1684 = vmatprep.subr.mxu0 0.0
    %1685 = vmatpush1.msra.mxu0 0.0
    %1686 = vmatprep.subr.mxu0 0.0
    %1687 = vmatpush1.msra.mxu0 0.0
    %1688 = vmatprep.subr.mxu0 0.0
    %1689 = vmatpush1.msra.mxu0 0.0
    %1690 = vmatprep.subr.mxu0 0.0
    %1691 = vmatpush1.msra.mxu0 0.0
    %1692 = vmatprep.subr.mxu0 0.0
    %1693 = vmatpush1.msra.mxu0 0.0
    %1694 = vmatprep.subr.mxu0 0.0
    %1695 = vmatpush1.msra.mxu0 0.0
    %1696 = vmatprep.subr.mxu0 0.0
    %1697 = vmatpush1.msra.mxu0 0.0
    %1698 = vmatprep.subr.mxu0 0.0
    %1699 = vmatpush1.msra.mxu0 0.0
    %1700 = vmatprep.subr.mxu0 0.0
    %1701 = vmatpush1.msra.mxu0 0.0
    %1702 = vmatprep.subr.mxu0 0.0
    %1703 = vmatpush1.msra.mxu0 0.0
    %1704 = vmatprep.subr.mxu0 0.0
    %1705 = vmatpush1.msra.mxu0 0.0
    %1706 = vmatprep.subr.mxu0 0.0
    %1707 = vmatpush1.msra.mxu0 0.0
    %1708 = vmatprep.subr.mxu0 0.0
    %1709 = vmatpush1.msra.mxu0 0.0
    %1710 = vmatprep.subr.mxu0 0.0
    %1711 = vmatpush1.msra.mxu0 0.0
    %1712 = vmatprep.subr.mxu0 0.0
    %1713 = vmatpush1.msra.mxu0 0.0
    %1714 = vmatprep.subr.mxu0 0.0
    %1715 = vmatpush1.msra.mxu0 0.0
    %1716 = vmatprep.subr.mxu0 0.0
    %1717 = vmatpush1.msra.mxu0 0.0
    %1718 = vmatprep.mubr.f32.mxu0 0.0
    %1719 = vmatmul.mubr.f32.gmra.mrb[0].mxu0 %v1652
    %v1720 = vpop.f32.mrb[0].mxu0
    %v1721 = vadd.f32 0.0, %v1720
    %v1722 = vpop.f32.mrb[0].mxu0
    %1723 = vdwg.mxu0
    %v1725 = vsel %vm1124, %v1212, 0
    %1727 = vmatprep.subr.mxu0 0.0
    %1728 = vmatpush1.msra.mxu0 %v555
    %1729 = vmatprep.subr.mxu0 0.0
    %1730 = vmatpush1.msra.mxu0 0.0
    %1731 = vmatprep.subr.mxu0 0.0
    %1732 = vmatpush1.msra.mxu0 0.0
    %1733 = vmatprep.subr.mxu0 0.0
    %1734 = vmatpush1.msra.mxu0 0.0
    %1735 = vmatprep.subr.mxu0 0.0
    %1736 = vmatpush1.msra.mxu0 0.0
    %1737 = vmatprep.subr.mxu0 0.0
    %1738 = vmatpush1.msra.mxu0 0.0
    %1739 = vmatprep.subr.mxu0 0.0
    %1740 = vmatpush1.msra.mxu0 0.0
    %1741 = vmatprep.subr.mxu0 0.0
    %1742 = vmatpush1.msra.mxu0 0.0
    %1743 = vmatprep.subr.mxu0 0.0
    %1744 = vmatpush1.msra.mxu0 0.0
    %1745 = vmatprep.subr.mxu0 0.0
    %1746 = vmatpush1.msra.mxu0 0.0
    %1747 = vmatprep.subr.mxu0 0.0
    %1748 = vmatpush1.msra.mxu0 0.0
    %1749 = vmatprep.subr.mxu0 0.0
    %1750 = vmatpush1.msra.mxu0 0.0
    %1751 = vmatprep.subr.mxu0 0.0
    %1752 = vmatpush1.msra.mxu0 0.0
    %1753 = vmatprep.subr.mxu0 0.0
    %1754 = vmatpush1.msra.mxu0 0.0
    %1755 = vmatprep.subr.mxu0 0.0
    %1756 = vmatpush1.msra.mxu0 0.0
    %1757 = vmatprep.subr.mxu0 0.0
    %1758 = vmatpush1.msra.mxu0 0.0
    %1759 = vmatprep.subr.mxu0 0.0
    %1760 = vmatpush1.msra.mxu0 0.0
    %1761 = vmatprep.subr.mxu0 0.0
    %1762 = vmatpush1.msra.mxu0 0.0
    %1763 = vmatprep.subr.mxu0 0.0
    %1764 = vmatpush1.msra.mxu0 0.0
    %1765 = vmatprep.subr.mxu0 0.0
    %1766 = vmatpush1.msra.mxu0 0.0
    %1767 = vmatprep.subr.mxu0 0.0
    %1768 = vmatpush1.msra.mxu0 0.0
    %1769 = vmatprep.subr.mxu0 0.0
    %1770 = vmatpush1.msra.mxu0 0.0
    %1771 = vmatprep.subr.mxu0 0.0
    %1772 = vmatpush1.msra.mxu0 0.0
    %1773 = vmatprep.subr.mxu0 0.0
    %1774 = vmatpush1.msra.mxu0 0.0
    %1775 = vmatprep.subr.mxu0 0.0
    %1776 = vmatpush1.msra.mxu0 0.0
    %1777 = vmatprep.subr.mxu0 0.0
    %1778 = vmatpush1.msra.mxu0 0.0
    %1779 = vmatprep.subr.mxu0 0.0
    %1780 = vmatpush1.msra.mxu0 0.0
    %1781 = vmatprep.subr.mxu0 0.0
    %1782 = vmatpush1.msra.mxu0 0.0
    %1783 = vmatprep.subr.mxu0 0.0
    %1784 = vmatpush1.msra.mxu0 0.0
    %1785 = vmatprep.subr.mxu0 0.0
    %1786 = vmatpush1.msra.mxu0 0.0
    %1787 = vmatprep.subr.mxu0 0.0
    %1788 = vmatpush1.msra.mxu0 0.0
    %1789 = vmatprep.subr.mxu0 0.0
    %1790 = vmatpush1.msra.mxu0 0.0
    %1791 = vmatprep.mubr.f32.mxu0 0.0
    %1792 = vmatmul.mubr.f32.gmra.mrb[0].mxu0 %v1725
    %v1793 = vpop.f32.mrb[0].mxu0
    %v1794 = vadd.f32 0.0, %v1793
    %v1795 = vpop.f32.mrb[0].mxu0
    %1796 = vdwg.mxu0
    %v1797 = vadd.f32 %v1283, %v1356
    %v1798 = vadd.f32 %v1797, %v1429
    %v1799 = vadd.f32 %v1798, %v1502
    %v1800 = vadd.f32 %v1575, %v1648
    %v1801 = vadd.f32 %v1800, %v1721
    %v1802 = vadd.f32 %v1801, %v1794
    %v1803 = vld [vmem:[#allocation10] sm:$0xff]
    %v1804 = vld [vmem:[#allocation10 + $0x8] sm:$0xff]
    %v1805 = vld [vmem:[#allocation10 + $0x10] sm:$0xff]
    %v1806 = vld [vmem:[#allocation10 + $0x18] sm:$0xff]
    %v1807 = vld [vmem:[#allocation10 + $0x20] sm:$0xff]
    %v1808 = vld [vmem:[#allocation10 + $0x28] sm:$0xff]
    %v1809 = vld [vmem:[#allocation10 + $0x30] sm:$0xff]
    %v1810 = vld [vmem:[#allocation10 + $0x38] sm:$0xff]
    %v1811 = vld [vmem:[#allocation10 + $0x40] sm:$0xff]
    %v1812 = vld [vmem:[#allocation10 + $0x48] sm:$0xff]
    %v1813 = vld [vmem:[#allocation10 + $0x50] sm:$0xff]
    %v1814 = vld [vmem:[#allocation10 + $0x58] sm:$0xff]
    %v1815 = vld [vmem:[#allocation10 + $0x60] sm:$0xff]
    %v1816 = vld [vmem:[#allocation10 + $0x68] sm:$0xff]
    %v1817 = vld [vmem:[#allocation10 + $0x70] sm:$0xff]
    %v1818 = vld [vmem:[#allocation10 + $0x78] sm:$0xff]
    %1819 = vmatprep.subr.mxu0 0.0
    %1820 = vmatpush1.msra.mxu0 %v1803
    %1821 = vmatprep.subr.mxu0 0.0
    %1822 = vmatpush1.msra.mxu0 %v1804
    %1823 = vmatprep.subr.mxu0 0.0
    %1824 = vmatpush1.msra.mxu0 %v1805
    %1825 = vmatprep.subr.mxu0 0.0
    %1826 = vmatpush1.msra.mxu0 %v1806
    %1827 = vmatprep.subr.mxu0 0.0
    %1828 = vmatpush1.msra.mxu0 %v1807
    %1829 = vmatprep.subr.mxu0 0.0
    %1830 = vmatpush1.msra.mxu0 %v1808
    %1831 = vmatprep.subr.mxu0 0.0
    %1832 = vmatpush1.msra.mxu0 %v1809
    %1833 = vmatprep.subr.mxu0 0.0
    %1834 = vmatpush1.msra.mxu0 %v1810
    %1835 = vmatprep.subr.mxu0 0.0
    %1836 = vmatpush1.msra.mxu0 %v1811
    %1837 = vmatprep.subr.mxu0 0.0
    %1838 = vmatpush1.msra.mxu0 %v1812
    %1839 = vmatprep.subr.mxu0 0.0
    %1840 = vmatpush1.msra.mxu0 %v1813
    %1841 = vmatprep.subr.mxu0 0.0
    %1842 = vmatpush1.msra.mxu0 %v1814
    %1843 = vmatprep.subr.mxu0 0.0
    %1844 = vmatpush1.msra.mxu0 %v1815
    %1845 = vmatprep.subr.mxu0 0.0
    %1846 = vmatpush1.msra.mxu0 %v1816
    %1847 = vmatprep.subr.mxu0 0.0
    %1848 = vmatpush1.msra.mxu0 %v1817
    %1849 = vmatprep.subr.mxu0 0.0
    %1850 = vmatpush1.msra.mxu0 %v1818
    %1851 = vmatprep.subr.mxu0 0.0
    %1852 = vmatpush1.msra.mxu0 0.0
    %1853 = vmatprep.subr.mxu0 0.0
    %1854 = vmatpush1.msra.mxu0 0.0
    %1855 = vmatprep.subr.mxu0 0.0
    %1856 = vmatpush1.msra.mxu0 0.0
    %1857 = vmatprep.subr.mxu0 0.0
    %1858 = vmatpush1.msra.mxu0 0.0
    %1859 = vmatprep.subr.mxu0 0.0
    %1860 = vmatpush1.msra.mxu0 0.0
    %1861 = vmatprep.subr.mxu0 0.0
    %1862 = vmatpush1.msra.mxu0 0.0
    %1863 = vmatprep.subr.mxu0 0.0
    %1864 = vmatpush1.msra.mxu0 0.0
    %1865 = vmatprep.subr.mxu0 0.0
    %1866 = vmatpush1.msra.mxu0 0.0
    %1867 = vmatprep.subr.mxu0 0.0
    %1868 = vmatpush1.msra.mxu0 0.0
    %1869 = vmatprep.subr.mxu0 0.0
    %1870 = vmatpush1.msra.mxu0 0.0
    %1871 = vmatprep.subr.mxu0 0.0
    %1872 = vmatpush1.msra.mxu0 0.0
    %1873 = vmatprep.subr.mxu0 0.0
    %1874 = vmatpush1.msra.mxu0 0.0
    %1875 = vmatprep.subr.mxu0 0.0
    %1876 = vmatpush1.msra.mxu0 0.0
    %1877 = vmatprep.subr.mxu0 0.0
    %1878 = vmatpush1.msra.mxu0 0.0
    %1879 = vmatprep.subr.mxu0 0.0
    %1880 = vmatpush1.msra.mxu0 0.0
    %1881 = vmatprep.subr.mxu0 0.0
    %1882 = vmatpush1.msra.mxu0 0.0
    %1883 = vmatprep.mubr.f32.mxu0 0.0
    %1884 = vmatmul.mubr.f32.gmra.mrb[0].mxu0 %v1799
    %v1885 = vpop.f32.mrb[0].mxu0
    %v1886 = vadd.f32 0.0, %v1885
    %v1887 = vpop.f32.mrb[0].mxu0
    %1888 = vmatprep.mubr.f32.mxu0 0.0
    %1889 = vmatmul.mubr.f32.gmra.mrb[0].mxu0 %v1802
    %v1890 = vpop.f32.mrb[0].mxu0
    %v1891 = vadd.f32 0.0, %v1890
    %v1892 = vpop.f32.mrb[0].mxu0
    %1893 = vdwg.mxu0
    %v1894 = vadd.f32 %v191, %v1886
    %v1895 = vadd.f32 %v192, %v1891
    %v1896 = vld [vmem:[%s10] sm:$0x1]
    %v1897 = vmul.f32 %v1894, %v1894
    %v1898 = vmul.f32 %v1895, %v1895
    %1899 = vadd.xlane.f32.xlu0 %v1897
    %v1900 = vpop.xlane.xlu0 %1899
    %1901 = vadd.xlane.f32.xlu0 %v1898
    %v1902 = vpop.xlane.xlu0 %1901
    %v1903 = vmul.f32 %v1900, 0.03125
    %v1904 = vmul.f32 %v1902, 0.03125
    %v1905 = vadd.f32 %v1903, 1e-05
    %v1906 = vadd.f32 %v1904, 1e-05
    %v1907 = vrsqrt.pop %v1905
    %v1908 = vrsqrt.pop %v1906
    %v1909 = vmul.f32 %v1894, %v1907
    %v1910 = vmul.f32 %v1895, %v1908
    %v1912 = vlaneseq
    %v1913 = vshrl.u32 %v1912, 7
    %v1914 = vsub.s32 0, %v1913
    %v1915 = vrot.slane %v1896, %v1914
    %v1917 = vmul.f32 %v1909, %v1915
    %v1918 = vmul.f32 %v1910, %v1915
    %v1919 = vld [vmem:[#allocation16] sm:$0xff]
    %v1920 = vld [vmem:[#allocation16 + $0x8] sm:$0xff]
    %v1921 = vld [vmem:[#allocation16 + $0x10] sm:$0xff]
    %v1922 = vld [vmem:[#allocation16 + $0x18] sm:$0xff]
    %v1923 = vld [vmem:[#allocation16 + $0x20] sm:$0xff]
    %v1924 = vld [vmem:[#allocation16 + $0x28] sm:$0xff]
    %v1925 = vld [vmem:[#allocation16 + $0x30] sm:$0xff]
    %v1926 = vld [vmem:[#allocation16 + $0x38] sm:$0xff]
    %v1927 = vld [vmem:[#allocation16 + $0x40] sm:$0xff]
    %v1928 = vld [vmem:[#allocation16 + $0x48] sm:$0xff]
    %v1929 = vld [vmem:[#allocation16 + $0x50] sm:$0xff]
    %v1930 = vld [vmem:[#allocation16 + $0x58] sm:$0xff]
    %v1931 = vld [vmem:[#allocation16 + $0x60] sm:$0xff]
    %v1932 = vld [vmem:[#allocation16 + $0x68] sm:$0xff]
    %v1933 = vld [vmem:[#allocation16 + $0x70] sm:$0xff]
    %v1934 = vld [vmem:[#allocation16 + $0x78] sm:$0xff]
    %1935 = vmatprep.subr.mxu0 0.0
    %1936 = vmatpush1.msra.mxu0 %v1919
    %1937 = vmatprep.subr.mxu0 0.0
    %1938 = vmatpush1.msra.mxu0 %v1920
    %1939 = vmatprep.subr.mxu0 0.0
    %1940 = vmatpush1.msra.mxu0 %v1921
    %1941 = vmatprep.subr.mxu0 0.0
    %1942 = vmatpush1.msra.mxu0 %v1922
    %1943 = vmatprep.subr.mxu0 0.0
    %1944 = vmatpush1.msra.mxu0 %v1923
    %1945 = vmatprep.subr.mxu0 0.0
    %1946 = vmatpush1.msra.mxu0 %v1924
    %1947 = vmatprep.subr.mxu0 0.0
    %1948 = vmatpush1.msra.mxu0 %v1925
    %1949 = vmatprep.subr.mxu0 0.0
    %1950 = vmatpush1.msra.mxu0 %v1926
    %1951 = vmatprep.subr.mxu0 0.0
    %1952 = vmatpush1.msra.mxu0 %v1927
    %1953 = vmatprep.subr.mxu0 0.0
    %1954 = vmatpush1.msra.mxu0 %v1928
    %1955 = vmatprep.subr.mxu0 0.0
    %1956 = vmatpush1.msra.mxu0 %v1929
    %1957 = vmatprep.subr.mxu0 0.0
    %1958 = vmatpush1.msra.mxu0 %v1930
    %1959 = vmatprep.subr.mxu0 0.0
    %1960 = vmatpush1.msra.mxu0 %v1931
    %1961 = vmatprep.subr.mxu0 0.0
    %1962 = vmatpush1.msra.mxu0 %v1932
    %1963 = vmatprep.subr.mxu0 0.0
    %1964 = vmatpush1.msra.mxu0 %v1933
    %1965 = vmatprep.subr.mxu0 0.0
    %1966 = vmatpush1.msra.mxu0 %v1934
    %1967 = vmatprep.subr.mxu0 0.0
    %1968 = vmatpush1.msra.mxu0 0.0
    %1969 = vmatprep.subr.mxu0 0.0
    %1970 = vmatpush1.msra.mxu0 0.0
    %1971 = vmatprep.subr.mxu0 0.0
    %1972 = vmatpush1.msra.mxu0 0.0
    %1973 = vmatprep.subr.mxu0 0.0
    %1974 = vmatpush1.msra.mxu0 0.0
    %1975 = vmatprep.subr.mxu0 0.0
    %1976 = vmatpush1.msra.mxu0 0.0
    %1977 = vmatprep.subr.mxu0 0.0
    %1978 = vmatpush1.msra.mxu0 0.0
    %1979 = vmatprep.subr.mxu0 0.0
    %1980 = vmatpush1.msra.mxu0 0.0
    %1981 = vmatprep.subr.mxu0 0.0
    %1982 = vmatpush1.msra.mxu0 0.0
    %1983 = vmatprep.subr.mxu0 0.0
    %1984 = vmatpush1.msra.mxu0 0.0
    %1985 = vmatprep.subr.mxu0 0.0
    %1986 = vmatpush1.msra.mxu0 0.0
    %1987 = vmatprep.subr.mxu0 0.0
    %1988 = vmatpush1.msra.mxu0 0.0
    %1989 = vmatprep.subr.mxu0 0.0
    %1990 = vmatpush1.msra.mxu0 0.0
    %1991 = vmatprep.subr.mxu0 0.0
    %1992 = vmatpush1.msra.mxu0 0.0
    %1993 = vmatprep.subr.mxu0 0.0
    %1994 = vmatpush1.msra.mxu0 0.0
    %1995 = vmatprep.subr.mxu0 0.0
    %1996 = vmatpush1.msra.mxu0 0.0
    %1997 = vmatprep.subr.mxu0 0.0
    %1998 = vmatpush1.msra.mxu0 0.0
    %1999 = vmatprep.mubr.f32.mxu0 0.0
    %2000 = vmatmul.mubr.f32.gmra.mrb[0].mxu0 %v1917
    %v2001 = vpop.f32.mrb[0].mxu0
    %v2002 = vadd.f32 0.0, %v2001
    %v2003 = vpop.f32.mrb[0].mxu0
    %2004 = vmatprep.mubr.f32.mxu0 0.0
    %2005 = vmatmul.mubr.f32.gmra.mrb[0].mxu0 %v1918
    %v2006 = vpop.f32.mrb[0].mxu0
    %v2007 = vadd.f32 0.0, %v2006
    %v2008 = vpop.f32.mrb[0].mxu0
    %2009 = vdwg.mxu0
    %v2010 = vld [vmem:[#allocation19] sm:$0xff]
    %v2011 = vld [vmem:[#allocation19 + $0x8] sm:$0xff]
    %v2012 = vld [vmem:[#allocation19 + $0x10] sm:$0xff]
    %v2013 = vld [vmem:[#allocation19 + $0x18] sm:$0xff]
    %v2014 = vld [vmem:[#allocation19 + $0x20] sm:$0xff]
    %v2015 = vld [vmem:[#allocation19 + $0x28] sm:$0xff]
    %v2016 = vld [vmem:[#allocation19 + $0x30] sm:$0xff]
    %v2017 = vld [vmem:[#allocation19 + $0x38] sm:$0xff]
    %v2018 = vld [vmem:[#allocation19 + $0x40] sm:$0xff]
    %v2019 = vld [vmem:[#allocation19 + $0x48] sm:$0xff]
    %v2020 = vld [vmem:[#allocation19 + $0x50] sm:$0xff]
    %v2021 = vld [vmem:[#allocation19 + $0x58] sm:$0xff]
    %v2022 = vld [vmem:[#allocation19 + $0x60] sm:$0xff]
    %v2023 = vld [vmem:[#allocation19 + $0x68] sm:$0xff]
    %v2024 = vld [vmem:[#allocation19 + $0x70] sm:$0xff]
    %v2025 = vld [vmem:[#allocation19 + $0x78] sm:$0xff]
    %2026 = vmatprep.subr.mxu0 0.0
    %2027 = vmatpush1.msra.mxu0 %v2010
    %2028 = vmatprep.subr.mxu0 0.0
    %2029 = vmatpush1.msra.mxu0 %v2011
    %2030 = vmatprep.subr.mxu0 0.0
    %2031 = vmatpush1.msra.mxu0 %v2012
    %2032 = vmatprep.subr.mxu0 0.0
    %2033 = vmatpush1.msra.mxu0 %v2013
    %2034 = vmatprep.subr.mxu0 0.0
    %2035 = vmatpush1.msra.mxu0 %v2014
    %2036 = vmatprep.subr.mxu0 0.0
    %2037 = vmatpush1.msra.mxu0 %v2015
    %2038 = vmatprep.subr.mxu0 0.0
    %2039 = vmatpush1.msra.mxu0 %v2016
    %2040 = vmatprep.subr.mxu0 0.0
    %2041 = vmatpush1.msra.mxu0 %v2017
    %2042 = vmatprep.subr.mxu0 0.0
    %2043 = vmatpush1.msra.mxu0 %v2018
    %2044 = vmatprep.subr.mxu0 0.0
    %2045 = vmatpush1.msra.mxu0 %v2019
    %2046 = vmatprep.subr.mxu0 0.0
    %2047 = vmatpush1.msra.mxu0 %v2020
    %2048 = vmatprep.subr.mxu0 0.0
    %2049 = vmatpush1.msra.mxu0 %v2021
    %2050 = vmatprep.subr.mxu0 0.0
    %2051 = vmatpush1.msra.mxu0 %v2022
    %2052 = vmatprep.subr.mxu0 0.0
    %2053 = vmatpush1.msra.mxu0 %v2023
    %2054 = vmatprep.subr.mxu0 0.0
    %2055 = vmatpush1.msra.mxu0 %v2024
    %2056 = vmatprep.subr.mxu0 0.0
    %2057 = vmatpush1.msra.mxu0 %v2025
    %2058 = vmatprep.subr.mxu0 0.0
    %2059 = vmatpush1.msra.mxu0 0.0
    %2060 = vmatprep.subr.mxu0 0.0
    %2061 = vmatpush1.msra.mxu0 0.0
    %2062 = vmatprep.subr.mxu0 0.0
    %2063 = vmatpush1.msra.mxu0 0.0
    %2064 = vmatprep.subr.mxu0 0.0
    %2065 = vmatpush1.msra.mxu0 0.0
    %2066 = vmatprep.subr.mxu0 0.0
    %2067 = vmatpush1.msra.mxu0 0.0
    %2068 = vmatprep.subr.mxu0 0.0
    %2069 = vmatpush1.msra.mxu0 0.0
    %2070 = vmatprep.subr.mxu0 0.0
    %2071 = vmatpush1.msra.mxu0 0.0
    %2072 = vmatprep.subr.mxu0 0.0
    %2073 = vmatpush1.msra.mxu0 0.0
    %2074 = vmatprep.subr.mxu0 0.0
    %2075 = vmatpush1.msra.mxu0 0.0
    %2076 = vmatprep.subr.mxu0 0.0
    %2077 = vmatpush1.msra.mxu0 0.0
    %2078 = vmatprep.subr.mxu0 0.0
    %2079 = vmatpush1.msra.mxu0 0.0
    %2080 = vmatprep.subr.mxu0 0.0
    %2081 = vmatpush1.msra.mxu0 0.0
    %2082 = vmatprep.subr.mxu0 0.0
    %2083 = vmatpush1.msra.mxu0 0.0
    %2084 = vmatprep.subr.mxu0 0.0
    %2085 = vmatpush1.msra.mxu0 0.0
    %2086 = vmatprep.subr.mxu0 0.0
    %2087 = vmatpush1.msra.mxu0 0.0
    %2088 = vmatprep.subr.mxu0 0.0
    %2089 = vmatpush1.msra.mxu0 0.0
    %2090 = vmatprep.mubr.f32.mxu0 0.0
    %2091 = vmatmul.mubr.f32.gmra.mrb[0].mxu0 %v1917
    %v2092 = vpop.f32.mrb[0].mxu0
    %v2093 = vadd.f32 0.0, %v2092
    %v2094 = vpop.f32.mrb[0].mxu0
    %2095 = vmatprep.mubr.f32.mxu0 0.0
    %2096 = vmatmul.mubr.f32.gmra.mrb[0].mxu0 %v1918
    %v2097 = vpop.f32.mrb[0].mxu0
    %v2098 = vadd.f32 0.0, %v2097
    %v2099 = vpop.f32.mrb[0].mxu0
    %2100 = vdwg.mxu0
    %v2101 = vxor.u32 %v2002, 2147483648
    %v2102 = vxor.u32 %v2007, 2147483648
    %v2103 = vmul.f32 %v2101, 1.442695
    %v2104 = vpow.pop %v2103
    %v2105 = vmul.f32 %v2102, 1.442695
    %v2106 = vpow.pop %v2105
    %v2107 = vadd.f32 %v2104, 1.0
    %v2108 = vadd.f32 %v2106, 1.0
    %v2109 = vrcp.pop %v2107
    %v2110 = vmul.f32 1.0, %v2109
    %v2111 = vrcp.pop %v2108
    %v2112 = vmul.f32 1.0, %v2111
    %v2113 = vmul.f32 %v2002, %v2110
    %v2114 = vmul.f32 %v2007, %v2112
    %v2115 = vmul.f32 %v2113, %v2093
    %v2116 = vmul.f32 %v2114, %v2098
    %v2117 = vld [vmem:[#allocation17] sm:$0xff]
    %v2118 = vld [vmem:[#allocation17 + $0x8] sm:$0xff]
    %v2119 = vld [vmem:[#allocation17 + $0x10] sm:$0xff]
    %v2120 = vld [vmem:[#allocation17 + $0x18] sm:$0xff]
    %v2121 = vld [vmem:[#allocation17 + $0x20] sm:$0xff]
    %v2122 = vld [vmem:[#allocation17 + $0x28] sm:$0xff]
    %v2123 = vld [vmem:[#allocation17 + $0x30] sm:$0xff]
    %v2124 = vld [vmem:[#allocation17 + $0x38] sm:$0xff]
    %v2125 = vld [vmem:[#allocation17 + $0x40] sm:$0xff]
    %v2126 = vld [vmem:[#allocation17 + $0x48] sm:$0xff]
    %v2127 = vld [vmem:[#allocation17 + $0x50] sm:$0xff]
    %v2128 = vld [vmem:[#allocation17 + $0x58] sm:$0xff]
    %v2129 = vld [vmem:[#allocation17 + $0x60] sm:$0xff]
    %v2130 = vld [vmem:[#allocation17 + $0x68] sm:$0xff]
    %v2131 = vld [vmem:[#allocation17 + $0x70] sm:$0xff]
    %v2132 = vld [vmem:[#allocation17 + $0x78] sm:$0xff]
    %2133 = vmatprep.subr.mxu0 0.0
    %2134 = vmatpush1.msra.mxu0 %v2117
    %2135 = vmatprep.subr.mxu0 0.0
    %2136 = vmatpush1.msra.mxu0 %v2118
    %2137 = vmatprep.subr.mxu0 0.0
    %2138 = vmatpush1.msra.mxu0 %v2119
    %2139 = vmatprep.subr.mxu0 0.0
    %2140 = vmatpush1.msra.mxu0 %v2120
    %2141 = vmatprep.subr.mxu0 0.0
    %2142 = vmatpush1.msra.mxu0 %v2121
    %2143 = vmatprep.subr.mxu0 0.0
    %2144 = vmatpush1.msra.mxu0 %v2122
    %2145 = vmatprep.subr.mxu0 0.0
    %2146 = vmatpush1.msra.mxu0 %v2123
    %2147 = vmatprep.subr.mxu0 0.0
    %2148 = vmatpush1.msra.mxu0 %v2124
    %2149 = vmatprep.subr.mxu0 0.0
    %2150 = vmatpush1.msra.mxu0 %v2125
    %2151 = vmatprep.subr.mxu0 0.0
    %2152 = vmatpush1.msra.mxu0 %v2126
    %2153 = vmatprep.subr.mxu0 0.0
    %2154 = vmatpush1.msra.mxu0 %v2127
    %2155 = vmatprep.subr.mxu0 0.0
    %2156 = vmatpush1.msra.mxu0 %v2128
    %2157 = vmatprep.subr.mxu0 0.0
    %2158 = vmatpush1.msra.mxu0 %v2129
    %2159 = vmatprep.subr.mxu0 0.0
    %2160 = vmatpush1.msra.mxu0 %v2130
    %2161 = vmatprep.subr.mxu0 0.0
    %2162 = vmatpush1.msra.mxu0 %v2131
    %2163 = vmatprep.subr.mxu0 0.0
    %2164 = vmatpush1.msra.mxu0 %v2132
    %2165 = vmatprep.subr.mxu0 0.0
    %2166 = vmatpush1.msra.mxu0 0.0
    %2167 = vmatprep.subr.mxu0 0.0
    %2168 = vmatpush1.msra.mxu0 0.0
    %2169 = vmatprep.subr.mxu0 0.0
    %2170 = vmatpush1.msra.mxu0 0.0
    %2171 = vmatprep.subr.mxu0 0.0
    %2172 = vmatpush1.msra.mxu0 0.0
    %2173 = vmatprep.subr.mxu0 0.0
    %2174 = vmatpush1.msra.mxu0 0.0
    %2175 = vmatprep.subr.mxu0 0.0
    %2176 = vmatpush1.msra.mxu0 0.0
    %2177 = vmatprep.subr.mxu0 0.0
    %2178 = vmatpush1.msra.mxu0 0.0
    %2179 = vmatprep.subr.mxu0 0.0
    %2180 = vmatpush1.msra.mxu0 0.0
    %2181 = vmatprep.subr.mxu0 0.0
    %2182 = vmatpush1.msra.mxu0 0.0
    %2183 = vmatprep.subr.mxu0 0.0
    %2184 = vmatpush1.msra.mxu0 0.0
    %2185 = vmatprep.subr.mxu0 0.0
    %2186 = vmatpush1.msra.mxu0 0.0
    %2187 = vmatprep.subr.mxu0 0.0
    %2188 = vmatpush1.msra.mxu0 0.0
    %2189 = vmatprep.subr.mxu0 0.0
    %2190 = vmatpush1.msra.mxu0 0.0
    %2191 = vmatprep.subr.mxu0 0.0
    %2192 = vmatpush1.msra.mxu0 0.0
    %2193 = vmatprep.subr.mxu0 0.0
    %2194 = vmatpush1.msra.mxu0 0.0
    %2195 = vmatprep.subr.mxu0 0.0
    %2196 = vmatpush1.msra.mxu0 0.0
    %2197 = vmatprep.mubr.f32.mxu0 0.0
    %2198 = vmatmul.mubr.f32.gmra.mrb[0].mxu0 %v2115
    %v2199 = vpop.f32.mrb[0].mxu0
    %v2200 = vadd.f32 0.0, %v2199
    %v2201 = vpop.f32.mrb[0].mxu0
    %2202 = vmatprep.mubr.f32.mxu0 0.0
    %2203 = vmatmul.mubr.f32.gmra.mrb[0].mxu0 %v2116
    %v2204 = vpop.f32.mrb[0].mxu0
    %v2205 = vadd.f32 0.0, %v2204
    %v2206 = vpop.f32.mrb[0].mxu0
    %2207 = vdwg.mxu0
    %v2208 = vadd.f32 %v1894, %v2200
    %v2209 = vadd.f32 %v1895, %v2205
    %2210 = vst [vmem:[#allocation20] sm:$0xff] %v2208
    %2211 = vst [vmem:[#allocation20 + $0x8] sm:$0xff] %v2209
    // Predicated region
    $region102: #{tpu_custom_call.1} parent=1 // pred_check
      _
    $region103: #{tpu_custom_call.1} parent=1 // pred_check_branch
      %2213 = sbr.rel (0) target = $region105
    $region104: #{tpu_custom_call.1} parent=1 // pred_region
      %s2215 = ssub.s32 256, 256
      %2216 = vsyncadd [#allocation4], %s2215
      %s2217 = sshll.u32 [#allocation20], 4
      %s2218 = int_to_ptr.vmem [resolvable:$true] %s2217
      %2223 = dma.vmem_to_hbm [thread:$0]  %s2218, 256, %s14, [#allocation4], 128, 128, 8
    $region105: #{tpu_custom_call.1} parent=1 // pred_fallthru
      _
    // Predicated region
    $region106: #{tpu_custom_call.1} parent=1 // pred_check
      _
    $region107: #{tpu_custom_call.1} parent=1 // pred_check_branch
      %2225 = sbr.rel (0) target = $region109
    $region108: #{tpu_custom_call.1} parent=1 // pred_region
      %2226 = dma.done [#allocation4], 256
    $region109: #{tpu_custom_call.1} parent=1 // pred_fallthru
      _
    %2227 = vsyncpa [#allocation3], 1
    %2228 = vsyncpa [#allocation6], 1
    %2229 = vsyncpa [#allocation9], 1
    %2230 = vsyncpa [#allocation12], 1
    %2231 = vsyncpa [#allocation15], 1
    %2232 = vsyncpa [#allocation18], 1
    %2233 = vsyncpa [#allocation4], 1

</llo_original>
